<compile_context>
chip_gen: v7x
topology: tpu7x:2x2x1
jax: 0.10.0
libtpu: 0.0.40
codegen_flags: <defaults>
</compile_context>

<pallas_src>
import functools
import math

import jax
import jax.numpy as jnp
import numpy as np
from jax import lax
from jax.experimental import pallas as pl
from jax.experimental.pallas import tpu as pltpu

NEG_BIG = -9e15       # same adjacency-mask constant as pyGAT
LANE = 128

# rows inside the misc-slab "vec" block
_B_C1B1, _B_C1B2, _B_C2B1, _B_C2B2, _B_C2B3, _B_ESQ, _B_AO1 = range(7)


# ----------------------------------------------------------------------------
# small in-kernel helpers (2D f32 arrays, row-wise)
# ----------------------------------------------------------------------------
def _softmax_rows(x):
    m = jnp.max(x, axis=1, keepdims=True)
    e = jnp.exp(x - m)
    return e * pl.reciprocal(jnp.sum(e, axis=1, keepdims=True), approx=True)


def _log_softmax_rows(x):
    m = jnp.max(x, axis=1, keepdims=True)
    s = x - m
    return s - jnp.log(jnp.sum(jnp.exp(s), axis=1, keepdims=True))


def _elu(x):
    return jnp.where(x > 0.0, x, jnp.exp(jnp.minimum(x, 0.0)) - 1.0)


# ----------------------------------------------------------------------------
# static slab layout (shared by prepare_params and the kernel)
# ----------------------------------------------------------------------------
def make_layout(*, input_channel, feature_channel, max_rl_num, gat_input_channel,
                gat_output_channel, gat_head_count, gat_alpha):
    P = LANE
    inter = input_channel * 3
    concat = inter // 8 + feature_channel
    H, Fo = gat_head_count, gat_output_channel

    assert inter % 16 == 0, "inter must be 16-row aligned for the bf16 slab"
    assert feature_channel % 16 == 0, "feature_channel must be 16-row aligned"
    assert Fo % 128 == 0, "per-head GAT width must be lane-tile aligned"
    assert H <= 16
    for w in (inter // 4, inter // 8, concat // 4, concat // 8,
              gat_input_channel, max_rl_num):
        assert w <= P, "intermediate widths must fit in one 128-lane tile"

    # classifier weight slab (bf16, width 128) -------------------------------
    cls, r = {}, 0
    for name, k in (("c1_w1", inter), ("c1_w2", P), ("c2_w1_pf", P),
                    ("c2_w1_seg", feature_channel), ("c2_w2", P), ("c2_w3", P)):
        cls[name] = (r, k)
        r += k
    cls_rows = r

    # GAT weight slab (bf16, width H*Fo) --------------------------------------
    gat, r = {}, 0
    for name, k in (("w_cat", P), ("w_out", H * Fo), ("a1", H * Fo),
                    ("a2", 16), ("ao2", 16)):
        gat[name] = (r, k)
        r += k
    gat_rows, gat_width = r, H * Fo

    # misc f32 slab (codebook / biases / e_sq / a_out1), width 128 ------------
    misc = {"emb": (0, P), "embt": (P, P), "vec": (2 * P, 8)}
    misc_rows = 2 * P + 8

    return dict(
        P=P, inter=inter, concat=concat,
        d_pf=inter // 8, d_gin=gat_input_channel, d_seg=feature_channel,
        n_class=max_rl_num, n_embed=max_rl_num,
        heads=H, fo=Fo, alpha=gat_alpha,
        cls=cls, cls_rows=cls_rows,
        gat=gat, gat_rows=gat_rows, gat_width=gat_width,
        misc=misc, misc_rows=misc_rows,
    )


# ----------------------------------------------------------------------------
# The single fused kernel
# ----------------------------------------------------------------------------
def _grm_fused_kernel(ctx_ref, seg_ref, adj_ref, wcls_ref, wgat_ref, misc_ref,
                      out_ref, diff_ref, hcat_ref, *, cfg):
    f32, bf16 = jnp.float32, jnp.bfloat16
    P = LANE
    H, Fo = cfg["heads"], cfg["fo"]
    n_class, n_embed, gin = cfg["n_class"], cfg["n_embed"], cfg["d_gin"]
    alpha = cfg["alpha"]
    m_rows = ctx_ref.shape[0]

    def wcls(name):
        r, k = cfg["cls"][name]
        return wcls_ref[r:r + k, :]

    def wgat(name, width=None):
        r, k = cfg["gat"][name]
        return wgat_ref[r:r + k, :] if width is None else wgat_ref[r:r + k, 0:width]

    vec_r = cfg["misc"]["vec"][0]
    vec = misc_ref[vec_r:vec_r + 8, :]                       # (8,128) f32: biases etc.

    def vrow(i):
        return vec[i:i + 1, :]

    def mm(a, w):                                            # bf16 MXU, f32 accumulate
        return jnp.dot(a.astype(bf16), w, preferred_element_type=f32)

    # ---- classifier1: Linear -> ReLU -> Linear -> ReLU ----------------------
    x = ctx_ref[...]                                         # (M, 3C) f32
    h = jnp.maximum(mm(x, wcls("c1_w1")) + vrow(_B_C1B1), 0.0)
    pf = jnp.maximum(mm(h, wcls("c1_w2")) + vrow(_B_C1B2), 0.0)

    # ---- classifier2: cat(pf, seg.expand) @ W == pf@Wp + seg@Ws --------------
    seg = seg_ref[...]                                       # (1, feature_channel)
    h = jnp.maximum(mm(pf, wcls("c2_w1_pf")) + mm(seg, wcls("c2_w1_seg"))
                    + vrow(_B_C2B1), 0.0)
    h = jnp.maximum(mm(h, wcls("c2_w2")) + vrow(_B_C2B2), 0.0)
    gat_in = jnp.maximum(mm(h, wcls("c2_w3")) + vrow(_B_C2B3), 0.0)  # (M,128) [:gin]

    # ---- Quantize: nearest codebook entry (exact f32) ------------------------
    er = cfg["misc"]["emb"][0]
    tr = cfg["misc"]["embt"][0]
    emb = misc_ref[er:er + P, :]                             # (128,128) real (gin, n_e)
    embt = misc_ref[tr:tr + P, :]                            # (128,128) real (n_e, gin)
    xe = jnp.dot(gat_in, emb, preferred_element_type=f32)    # (M,128)
    x_sq = jnp.sum(gat_in * gat_in, axis=1, keepdims=True)   # (M,1)
    dist = x_sq - 2.0 * xe + vrow(_B_ESQ)                    # (M,128)
    col = lax.broadcasted_iota(jnp.int32, dist.shape, 1)
    dist = jnp.where(col < n_embed, dist, jnp.inf)           # mask padded codes
    dmin = jnp.min(dist, axis=1, keepdims=True)
    first = jnp.min(jnp.where(dist <= dmin, col, dist.shape[1]), axis=1, keepdims=True)
    onehot = (col == first).astype(f32)                      # (M,128)
    quant = jnp.dot(onehot, embt, preferred_element_type=f32)  # (M,128) real [:gin]
    dq = quant - gat_in
    tot = jnp.sum(jnp.sum(dq * dq, axis=1, keepdims=True), axis=0, keepdims=True)
    diff_ref[...] = tot * (1.0 / float(m_rows * gin))

    # ---- GAT ------------------------------------------------------------------
    adj_mask = adj_ref[...] > 0.0
    neg = jnp.float32(NEG_BIG)

    wh_cat = mm(quant, wgat("w_cat"))                        # (M, H*Fo) f32
    wh_bf = wh_cat.astype(bf16)
    # batched attention scores: f1_all[:, h] = wh_h . a1_h ; f2_all[h, :] = wh_h . a2_h
    f1_all = jnp.dot(wh_bf, wgat("a1", P), preferred_element_type=f32)      # (M,128)
    f2_all = lax.dot_general(wgat("a2"), wh_bf, (((1,), (1,)), ((), ())),
                             preferred_element_type=f32)                    # (16, M)

    def attend(f1, f2row, rhs_bf):
        e = f1 + f2row                                       # (M, M)
        e = jnp.where(e > 0.0, e, alpha * e)                 # LeakyReLU
        att = _softmax_rows(jnp.where(adj_mask, e, neg))     # dropout: eval -> identity
        return jnp.dot(att.astype(bf16), rhs_bf, preferred_element_type=f32)

    # per-head attention; elu'd outputs stored lane-aligned into the bf16 scratch
    for hd in range(H):
        hp = _elu(attend(f1_all[:, hd:hd + 1], f2_all[hd:hd + 1, :],
                         wh_bf[:, hd * Fo:(hd + 1) * Fo]))
        hcat_ref[:, hd * Fo:(hd + 1) * Fo] = hp.astype(bf16)

    # single output projection (M, H*Fo) @ (H*Fo, 128[:n_class])
    wh_out = jnp.dot(hcat_ref[...], wgat("w_out", P), preferred_element_type=f32)
    wo_bf = wh_out.astype(bf16)
    f1o = jnp.sum(wh_out * vrow(_B_AO1), axis=1, keepdims=True)             # (M,1)
    f2o = lax.dot_general(wgat("ao2", P), wo_bf, (((1,), (1,)), ((), ())),
                          preferred_element_type=f32)[0:1, :]               # (1,M)
    final = attend(f1o, f2o, wo_bf)                                          # (M,128)
    out_ref[...] = _log_softmax_rows(_elu(final[:, :n_class]))               # exact f32


# ----------------------------------------------------------------------------
# Wrapper
# ----------------------------------------------------------------------------
def _vmem():
    return pl.BlockSpec(memory_space=pltpu.MemorySpace.VMEM)


def grm_forward(prepped, person_input, seg_feature, adj, *, layout):
    rl = person_input.shape[0]
    # TODO(synk): person_pair's internal backbone is not provided in the reference
    # source; it is modeled as flattening/concatenating the 3 per-pair vectors.
    ctx = person_input.reshape(rl, -1).astype(jnp.float32)
    seg_row = seg_feature.reshape(1, -1).astype(jnp.float32)
    adj = adj.astype(jnp.float32)

    kernel = functools.partial(_grm_fused_kernel, cfg=layout)
    out, diff = pl.pallas_call(
        kernel,
        out_shape=(jax.ShapeDtypeStruct((rl, layout["n_class"]), jnp.float32),
                   jax.ShapeDtypeStruct((1, 1), jnp.float32)),
        in_specs=[_vmem()] * 6,
        out_specs=(_vmem(), _vmem()),
        scratch_shapes=[pltpu.VMEM((rl, layout["heads"] * layout["fo"]),
                                   jnp.bfloat16)],
    )(ctx, seg_row, adj, prepped["w_cls"], prepped["w_gat"], prepped["misc"])
    return out, diff[0, 0]


# ----------------------------------------------------------------------------
# Parameter initialization (shapes follow GRM.__init__) + one-time slab packing
# ----------------------------------------------------------------------------
def _xavier_uniform(key, fan_in, fan_out, gain=1.0):
    limit = gain * math.sqrt(6.0 / (fan_in + fan_out))
    return jax.random.uniform(key, (fan_in, fan_out), minval=-limit, maxval=limit,
                              dtype=jnp.float32)


def init_grm_params(key, input_channel, feature_channel, max_rl_num,
                    gat_input_channel, gat_output_channel, gat_head_count):
    inter = input_channel * 3
    concat = inter // 8 + feature_channel
    keys = iter(jax.random.split(key, 32))
    p = {}
    # classifier1
    p["c1_w1"] = _xavier_uniform(next(keys), inter, inter // 4)
    p["c1_b1"] = jnp.full((inter // 4,), 0.0001, jnp.float32)
    p["c1_w2"] = _xavier_uniform(next(keys), inter // 4, inter // 8)
    p["c1_b2"] = jnp.full((inter // 8,), 0.0001, jnp.float32)
    # classifier2
    p["c2_w1"] = _xavier_uniform(next(keys), concat, concat // 4)
    p["c2_b1"] = jnp.full((concat // 4,), 0.0001, jnp.float32)
    p["c2_w2"] = _xavier_uniform(next(keys), concat // 4, concat // 8)
    p["c2_b2"] = jnp.full((concat // 8,), 0.0001, jnp.float32)
    p["c2_w3"] = _xavier_uniform(next(keys), concat // 8, gat_input_channel)
    p["c2_b3"] = jnp.full((gat_input_channel,), 0.0001, jnp.float32)
    # Quantize codebook: randn(dim, n_embed)
    p["vq_embed"] = jax.random.normal(next(keys), (gat_input_channel, max_rl_num),
                                      jnp.float32)
    # GAT heads (xavier uniform, gain=1.414 as in pyGAT)
    for h in range(gat_head_count):
        p[f"gat_W{h}"] = _xavier_uniform(next(keys), gat_input_channel,
                                         gat_output_channel, gain=1.414)
        p[f"gat_a{h}"] = _xavier_uniform(next(keys), 2 * gat_output_channel, 1,
                                         gain=1.414)
    p["gat_W_out"] = _xavier_uniform(next(keys), gat_output_channel * gat_head_count,
                                     max_rl_num, gain=1.414)
    p["gat_a_out"] = _xavier_uniform(next(keys), 2 * max_rl_num, 1, gain=1.414)
    return p


def prepare_params(p, layout):
    """One-time (outside jit) packing of all weights into 3 VMEM slabs."""
    P = LANE
    H, Fo = layout["heads"], layout["fo"]
    n_class = layout["n_class"]

    # --- classifier slab (bf16) ---------------------------------------------
    wcls = np.zeros((layout["cls_rows"], P), np.float32)

    def put_cls(name, arr):
        r, _ = layout["cls"][name]
        a = np.asarray(arr, np.float32)
        wcls[r:r + a.shape[0], :a.shape[1]] = a

    put_cls("c1_w1", p["c1_w1"])
    put_cls("c1_w2", p["c1_w2"])
    pf_dim = p["c1_w2"].shape[1]
    put_cls("c2_w1_pf", p["c2_w1"][:pf_dim, :])   # cat(pf,seg)@W == pf@Wp + seg@Ws
    put_cls("c2_w1_seg", p["c2_w1"][pf_dim:, :])
    put_cls("c2_w2", p["c2_w2"])
    put_cls("c2_w3", p["c2_w3"])

    # --- GAT slab (bf16) -------------------------------------------------------
    wgat = np.zeros((layout["gat_rows"], layout["gat_width"]), np.float32)
    r = layout["gat"]["w_cat"][0]
    wcat = np.concatenate([np.asarray(p[f"gat_W{h}"]) for h in range(H)], axis=1)
    wgat[r:r + wcat.shape[0], :wcat.shape[1]] = wcat
    r = layout["gat"]["w_out"][0]
    w_out = np.asarray(p["gat_W_out"])
    wgat[r:r + w_out.shape[0], :w_out.shape[1]] = w_out
    r1 = layout["gat"]["a1"][0]
    r2 = layout["gat"]["a2"][0]
    for h in range(H):
        a = np.asarray(p[f"gat_a{h}"])[:, 0]
        wgat[r1 + h * Fo:r1 + (h + 1) * Fo, h] = a[:Fo]          # block-column (f1)
        wgat[r2 + h, h * Fo:(h + 1) * Fo] = a[Fo:]               # block-row (f2)
    a_out = np.asarray(p["gat_a_out"])[:, 0]
    wgat[layout["gat"]["ao2"][0], :n_class] = a_out[n_class:]

    # --- misc f32 slab (codebook / biases / e_sq / a_out1) ----------------------
    misc = np.zeros((layout["misc_rows"], P), np.float32)
    emb = np.asarray(p["vq_embed"], np.float32)                  # (gin, n_embed)
    misc[0:emb.shape[0], 0:emb.shape[1]] = emb
    tr = layout["misc"]["embt"][0]
    misc[tr:tr + emb.shape[1], 0:emb.shape[0]] = emb.T
    vr = layout["misc"]["vec"][0]

    def put_vec(i, v):
        v = np.asarray(v, np.float32).reshape(-1)
        misc[vr + i, :v.shape[0]] = v

    put_vec(_B_C1B1, p["c1_b1"])
    put_vec(_B_C1B2, p["c1_b2"])
    put_vec(_B_C2B1, p["c2_b1"])
    put_vec(_B_C2B2, p["c2_b2"])
    put_vec(_B_C2B3, p["c2_b3"])
    put_vec(_B_ESQ, (emb * emb).sum(axis=0))                     # precomputed e_sq
    put_vec(_B_AO1, a_out[:n_class])

    return {
        "w_cls": jnp.asarray(wcls, jnp.bfloat16),
        "w_gat": jnp.asarray(wgat, jnp.bfloat16),
        "misc": jnp.asarray(misc, jnp.float32),
    }


# ----------------------------------------------------------------------------
if __name__ == "__main__":
    # Small shapes consistent with the module structure.
    INPUT_CHANNEL = 64        # -> inter = 192
    FEATURE_CHANNEL = 128     # -> concat = 24 + 128 = 152
    MAX_RL_NUM = 6
    GAT_INPUT_CHANNEL = 32
    GAT_OUTPUT_CHANNEL = 128  # per-head width lane-tile aligned
    GAT_HEADS = 3
    GAT_ALPHA = 0.2
    RL_COUNT = 5

    key = jax.random.PRNGKey(0)
    kp, kx, ks, ka = jax.random.split(key, 4)

    raw_params = init_grm_params(
        kp, INPUT_CHANNEL, FEATURE_CHANNEL, MAX_RL_NUM,
        GAT_INPUT_CHANNEL, GAT_OUTPUT_CHANNEL, GAT_HEADS)
    layout = make_layout(
        input_channel=INPUT_CHANNEL, feature_channel=FEATURE_CHANNEL,
        max_rl_num=MAX_RL_NUM, gat_input_channel=GAT_INPUT_CHANNEL,
        gat_output_channel=GAT_OUTPUT_CHANNEL, gat_head_count=GAT_HEADS,
        gat_alpha=GAT_ALPHA)
    prepped = prepare_params(raw_params, layout)

    person_input = jax.random.normal(kx, (RL_COUNT, 3, INPUT_CHANNEL), jnp.float32)
    seg_feature = jax.random.normal(ks, (FEATURE_CHANNEL,), jnp.float32)
    adj = (jax.random.uniform(ka, (RL_COUNT, RL_COUNT)) > 0.3).astype(jnp.float32)
    adj = jnp.maximum(adj, jnp.eye(RL_COUNT, dtype=jnp.float32))  # self-loops

    fwd = jax.jit(functools.partial(grm_forward, layout=layout))
    rl_output, diff = fwd(prepped, person_input, seg_feature, adj)
    jax.block_until_ready((rl_output, diff))

    assert rl_output.shape == (RL_COUNT, MAX_RL_NUM)
    assert diff.shape == ()
    assert bool(jnp.all(jnp.isfinite(rl_output)))
    assert bool(jnp.isfinite(diff))
    # log_softmax rows must exponentiate to ~1
    assert bool(jnp.allclose(jnp.sum(jnp.exp(rl_output), axis=1), 1.0, atol=1e-3))
    print("KERNEL_OK")
</pallas_src>

<mosaic_0001>
module attributes {stable_mosaic.version = 11 : i64} {
  func.func @_grm_fused_kernel(%arg0: memref<5x192xf32, #tpu.memory_space<vmem>>, %arg1: memref<1x128xf32, #tpu.memory_space<vmem>>, %arg2: memref<5x5xf32, #tpu.memory_space<vmem>>, %arg3: memref<832x128xbf16, #tpu.memory_space<vmem>>, %arg4: memref<928x384xbf16, #tpu.memory_space<vmem>>, %arg5: memref<264x128xf32, #tpu.memory_space<vmem>>, %arg6: memref<5x6xf32, #tpu.memory_space<vmem>>, %arg7: memref<1x1xf32, #tpu.memory_space<vmem>>, %arg8: memref<5x384xbf16, #tpu.memory_space<vmem>>) attributes {dimension_semantics = [], scalar_prefetch = 0 : i64, scratch_operands = 1 : i64, tpu.core_type = #tpu.core_type<tc>} {
    %c256 = arith.constant 256 : index
    %c0 = arith.constant 0 : index
    %0 = vector.load %arg5[%c256, %c0] : memref<264x128xf32, #tpu.memory_space<vmem>>, vector<8x128xf32>
    %c0_0 = arith.constant 0 : index
    %c0_1 = arith.constant 0 : index
    %1 = vector.load %arg0[%c0_0, %c0_1] : memref<5x192xf32, #tpu.memory_space<vmem>>, vector<5x192xf32>
    %c0_2 = arith.constant 0 : index
    %c0_3 = arith.constant 0 : index
    %2 = vector.load %arg3[%c0_2, %c0_3] : memref<832x128xbf16, #tpu.memory_space<vmem>>, vector<192x128xbf16>
    %3 = arith.truncf %1 : vector<5x192xf32> to vector<5x192xbf16>
    %cst = arith.constant dense<0.000000e+00> : vector<5x128xf32>
    %4 = tpu.matmul %3, %2, %cst {dimension_numbers = #tpu.dot_dimension_numbers<[1], [0], [0], [1], [0, 0, 1, 1], [], []>} : vector<5x192xbf16>, vector<192x128xbf16>, vector<5x128xf32> -> vector<5x128xf32>
    %5 = vector.extract_strided_slice %0 {offsets = [0, 0], sizes = [1, 128], strides = [1, 1]} : vector<8x128xf32> to vector<1x128xf32>
    %6 = vector.broadcast %5 : vector<1x128xf32> to vector<5x128xf32>
    %7 = arith.addf %4, %6 : vector<5x128xf32>
    %cst_4 = arith.constant 0.000000e+00 : f32
    %8 = vector.broadcast %cst_4 : f32 to vector<5x128xf32>
    %9 = arith.maximumf %7, %8 : vector<5x128xf32>
    %c192 = arith.constant 192 : index
    %c0_5 = arith.constant 0 : index
    %10 = vector.load %arg3[%c192, %c0_5] : memref<832x128xbf16, #tpu.memory_space<vmem>>, vector<128x128xbf16>
    %11 = arith.truncf %9 : vector<5x128xf32> to vector<5x128xbf16>
    %cst_6 = arith.constant dense<0.000000e+00> : vector<5x128xf32>
    %12 = tpu.matmul %11, %10, %cst_6 {dimension_numbers = #tpu.dot_dimension_numbers<[1], [0], [0], [1], [0, 0, 1, 1], [], []>} : vector<5x128xbf16>, vector<128x128xbf16>, vector<5x128xf32> -> vector<5x128xf32>
    %13 = vector.extract_strided_slice %0 {offsets = [1, 0], sizes = [1, 128], strides = [1, 1]} : vector<8x128xf32> to vector<1x128xf32>
    %14 = vector.broadcast %13 : vector<1x128xf32> to vector<5x128xf32>
    %15 = arith.addf %12, %14 : vector<5x128xf32>
    %cst_7 = arith.constant 0.000000e+00 : f32
    %16 = vector.broadcast %cst_7 : f32 to vector<5x128xf32>
    %17 = arith.maximumf %15, %16 : vector<5x128xf32>
    %c0_8 = arith.constant 0 : index
    %c0_9 = arith.constant 0 : index
    %18 = vector.load %arg1[%c0_8, %c0_9] : memref<1x128xf32, #tpu.memory_space<vmem>>, vector<1x128xf32>
    %c320 = arith.constant 320 : index
    %c0_10 = arith.constant 0 : index
    %19 = vector.load %arg3[%c320, %c0_10] : memref<832x128xbf16, #tpu.memory_space<vmem>>, vector<128x128xbf16>
    %20 = arith.truncf %17 : vector<5x128xf32> to vector<5x128xbf16>
    %cst_11 = arith.constant dense<0.000000e+00> : vector<5x128xf32>
    %21 = tpu.matmul %20, %19, %cst_11 {dimension_numbers = #tpu.dot_dimension_numbers<[1], [0], [0], [1], [0, 0, 1, 1], [], []>} : vector<5x128xbf16>, vector<128x128xbf16>, vector<5x128xf32> -> vector<5x128xf32>
    %c448 = arith.constant 448 : index
    %c0_12 = arith.constant 0 : index
    %22 = vector.load %arg3[%c448, %c0_12] : memref<832x128xbf16, #tpu.memory_space<vmem>>, vector<128x128xbf16>
    %23 = arith.truncf %18 : vector<1x128xf32> to vector<1x128xbf16>
    %cst_13 = arith.constant dense<0.000000e+00> : vector<1x128xf32>
    %24 = tpu.matmul %23, %22, %cst_13 {dimension_numbers = #tpu.dot_dimension_numbers<[1], [0], [0], [1], [0, 0, 1, 1], [], []>} : vector<1x128xbf16>, vector<128x128xbf16>, vector<1x128xf32> -> vector<1x128xf32>
    %25 = vector.broadcast %24 : vector<1x128xf32> to vector<5x128xf32>
    %26 = arith.addf %21, %25 : vector<5x128xf32>
    %27 = vector.extract_strided_slice %0 {offsets = [2, 0], sizes = [1, 128], strides = [1, 1]} : vector<8x128xf32> to vector<1x128xf32>
    %28 = vector.broadcast %27 : vector<1x128xf32> to vector<5x128xf32>
    %29 = arith.addf %26, %28 : vector<5x128xf32>
    %cst_14 = arith.constant 0.000000e+00 : f32
    %30 = vector.broadcast %cst_14 : f32 to vector<5x128xf32>
    %31 = arith.maximumf %29, %30 : vector<5x128xf32>
    %c576 = arith.constant 576 : index
    %c0_15 = arith.constant 0 : index
    %32 = vector.load %arg3[%c576, %c0_15] : memref<832x128xbf16, #tpu.memory_space<vmem>>, vector<128x128xbf16>
    %33 = arith.truncf %31 : vector<5x128xf32> to vector<5x128xbf16>
    %cst_16 = arith.constant dense<0.000000e+00> : vector<5x128xf32>
    %34 = tpu.matmul %33, %32, %cst_16 {dimension_numbers = #tpu.dot_dimension_numbers<[1], [0], [0], [1], [0, 0, 1, 1], [], []>} : vector<5x128xbf16>, vector<128x128xbf16>, vector<5x128xf32> -> vector<5x128xf32>
    %35 = vector.extract_strided_slice %0 {offsets = [3, 0], sizes = [1, 128], strides = [1, 1]} : vector<8x128xf32> to vector<1x128xf32>
    %36 = vector.broadcast %35 : vector<1x128xf32> to vector<5x128xf32>
    %37 = arith.addf %34, %36 : vector<5x128xf32>
    %cst_17 = arith.constant 0.000000e+00 : f32
    %38 = vector.broadcast %cst_17 : f32 to vector<5x128xf32>
    %39 = arith.maximumf %37, %38 : vector<5x128xf32>
    %c704 = arith.constant 704 : index
    %c0_18 = arith.constant 0 : index
    %40 = vector.load %arg3[%c704, %c0_18] : memref<832x128xbf16, #tpu.memory_space<vmem>>, vector<128x128xbf16>
    %41 = arith.truncf %39 : vector<5x128xf32> to vector<5x128xbf16>
    %cst_19 = arith.constant dense<0.000000e+00> : vector<5x128xf32>
    %42 = tpu.matmul %41, %40, %cst_19 {dimension_numbers = #tpu.dot_dimension_numbers<[1], [0], [0], [1], [0, 0, 1, 1], [], []>} : vector<5x128xbf16>, vector<128x128xbf16>, vector<5x128xf32> -> vector<5x128xf32>
    %43 = vector.extract_strided_slice %0 {offsets = [4, 0], sizes = [1, 128], strides = [1, 1]} : vector<8x128xf32> to vector<1x128xf32>
    %44 = vector.broadcast %43 : vector<1x128xf32> to vector<5x128xf32>
    %45 = arith.addf %42, %44 : vector<5x128xf32>
    %cst_20 = arith.constant 0.000000e+00 : f32
    %46 = vector.broadcast %cst_20 : f32 to vector<5x128xf32>
    %47 = arith.maximumf %45, %46 : vector<5x128xf32>
    %c0_21 = arith.constant 0 : index
    %c0_22 = arith.constant 0 : index
    %48 = vector.load %arg5[%c0_21, %c0_22] : memref<264x128xf32, #tpu.memory_space<vmem>>, vector<128x128xf32>
    %c128 = arith.constant 128 : index
    %c0_23 = arith.constant 0 : index
    %49 = vector.load %arg5[%c128, %c0_23] : memref<264x128xf32, #tpu.memory_space<vmem>>, vector<128x128xf32>
    %cst_24 = arith.constant dense<0.000000e+00> : vector<5x128xf32>
    %50 = tpu.matmul %47, %48, %cst_24 {dimension_numbers = #tpu.dot_dimension_numbers<[1], [0], [0], [1], [0, 0, 1, 1], [], []>} : vector<5x128xf32>, vector<128x128xf32>, vector<5x128xf32> -> vector<5x128xf32>
    %51 = arith.mulf %47, %47 : vector<5x128xf32>
    %cst_25 = arith.constant dense<0.000000e+00> : vector<5xf32>
    %52 = vector.multi_reduction <add>, %51, %cst_25 [1] : vector<5x128xf32> to vector<5xf32>
    %53 = vector.shape_cast %52 : vector<5xf32> to vector<5x1xf32>
    %cst_26 = arith.constant 2.000000e+00 : f32
    %54 = vector.broadcast %cst_26 : f32 to vector<5x128xf32>
    %55 = arith.mulf %54, %50 : vector<5x128xf32>
    %56 = vector.broadcast %53 : vector<5x1xf32> to vector<5x128xf32>
    %57 = arith.subf %56, %55 : vector<5x128xf32>
    %58 = vector.extract_strided_slice %0 {offsets = [5, 0], sizes = [1, 128], strides = [1, 1]} : vector<8x128xf32> to vector<1x128xf32>
    %59 = vector.broadcast %58 : vector<1x128xf32> to vector<5x128xf32>
    %60 = arith.addf %57, %59 : vector<5x128xf32>
    %61 = tpu.iota {dimensions = array<i32: 1>} : vector<5x128xi32>
    %c6_i32 = arith.constant 6 : i32
    %62 = vector.broadcast %c6_i32 : i32 to vector<5x128xi32>
    %63 = arith.cmpi slt, %61, %62 : vector<5x128xi32>
    %cst_27 = arith.constant 0x7F800000 : f32
    %64 = vector.broadcast %cst_27 : f32 to vector<5x128xf32>
    %65 = arith.select %63, %60, %64 : vector<5x128xi1>, vector<5x128xf32>
    %cst_28 = arith.constant dense<0x7F800000> : vector<5xf32>
    %66 = vector.multi_reduction <minimumf>, %65, %cst_28 [1] : vector<5x128xf32> to vector<5xf32>
    %67 = vector.shape_cast %66 : vector<5xf32> to vector<5x1xf32>
    %68 = vector.broadcast %67 : vector<5x1xf32> to vector<5x128xf32>
    %69 = arith.cmpf ole, %65, %68 : vector<5x128xf32>
    %c128_i32 = arith.constant 128 : i32
    %70 = vector.broadcast %c128_i32 : i32 to vector<5x128xi32>
    %71 = arith.select %69, %61, %70 : vector<5x128xi1>, vector<5x128xi32>
    %cst_29 = arith.constant dense<2147483647> : vector<5xi32>
    %72 = vector.multi_reduction <minsi>, %71, %cst_29 [1] : vector<5x128xi32> to vector<5xi32>
    %73 = vector.shape_cast %72 : vector<5xi32> to vector<5x1xi32>
    %74 = vector.broadcast %73 : vector<5x1xi32> to vector<5x128xi32>
    %75 = arith.cmpi eq, %61, %74 : vector<5x128xi32>
    %76 = arith.extui %75 : vector<5x128xi1> to vector<5x128xi32>
    %77 = arith.sitofp %76 : vector<5x128xi32> to vector<5x128xf32>
    %cst_30 = arith.constant dense<0.000000e+00> : vector<5x128xf32>
    %78 = tpu.matmul %77, %49, %cst_30 {dimension_numbers = #tpu.dot_dimension_numbers<[1], [0], [0], [1], [0, 0, 1, 1], [], []>} : vector<5x128xf32>, vector<128x128xf32>, vector<5x128xf32> -> vector<5x128xf32>
    %79 = arith.subf %78, %47 : vector<5x128xf32>
    %80 = arith.mulf %79, %79 : vector<5x128xf32>
    %cst_31 = arith.constant dense<0.000000e+00> : vector<5xf32>
    %81 = vector.multi_reduction <add>, %80, %cst_31 [1] : vector<5x128xf32> to vector<5xf32>
    %82 = vector.shape_cast %81 : vector<5xf32> to vector<5x1xf32>
    %cst_32 = arith.constant dense<0.000000e+00> : vector<1xf32>
    %83 = vector.multi_reduction <add>, %82, %cst_32 [0] : vector<5x1xf32> to vector<1xf32>
    %84 = vector.shape_cast %83 : vector<1xf32> to vector<1x1xf32>
    %cst_33 = arith.constant 6.250000e-03 : f32
    %85 = vector.broadcast %cst_33 : f32 to vector<1x1xf32>
    %86 = arith.mulf %84, %85 : vector<1x1xf32>
    %c0_34 = arith.constant 0 : index
    %c0_35 = arith.constant 0 : index
    %87 = vector.load %arg7[%c0_34, %c0_35] : memref<1x1xf32, #tpu.memory_space<vmem>>, vector<1x1xf32>
    tpu.vector_store %arg7[%c0_34, %c0_35], %86 {strides = array<i32>} : memref<1x1xf32, #tpu.memory_space<vmem>>, vector<1x1xf32>,
    %c0_36 = arith.constant 0 : index
    %c0_37 = arith.constant 0 : index
    %88 = vector.load %arg2[%c0_36, %c0_37] : memref<5x5xf32, #tpu.memory_space<vmem>>, vector<5x5xf32>
    %cst_38 = arith.constant 0.000000e+00 : f32
    %89 = vector.broadcast %cst_38 : f32 to vector<5x5xf32>
    %90 = arith.cmpf ogt, %88, %89 : vector<5x5xf32>
    %c0_39 = arith.constant 0 : index
    %c0_40 = arith.constant 0 : index
    %91 = vector.load %arg4[%c0_39, %c0_40] : memref<928x384xbf16, #tpu.memory_space<vmem>>, vector<128x384xbf16>
    %92 = arith.truncf %78 : vector<5x128xf32> to vector<5x128xbf16>
    %cst_41 = arith.constant dense<0.000000e+00> : vector<5x384xf32>
    %93 = tpu.matmul %92, %91, %cst_41 {dimension_numbers = #tpu.dot_dimension_numbers<[1], [0], [0], [1], [0, 0, 1, 1], [], []>} : vector<5x128xbf16>, vector<128x384xbf16>, vector<5x384xf32> -> vector<5x384xf32>
    %94 = arith.truncf %93 : vector<5x384xf32> to vector<5x384xbf16>
    %c512 = arith.constant 512 : index
    %c0_42 = arith.constant 0 : index
    %95 = vector.load %arg4[%c512, %c0_42] : memref<928x384xbf16, #tpu.memory_space<vmem>>, vector<384x128xbf16>
    %cst_43 = arith.constant dense<0.000000e+00> : vector<5x128xf32>
    %96 = tpu.matmul %94, %95, %cst_43 {dimension_numbers = #tpu.dot_dimension_numbers<[1], [0], [0], [1], [0, 0, 1, 1], [], []>} : vector<5x384xbf16>, vector<384x128xbf16>, vector<5x128xf32> -> vector<5x128xf32>
    %c896 = arith.constant 896 : index
    %c0_44 = arith.constant 0 : index
    %97 = vector.load %arg4[%c896, %c0_44] : memref<928x384xbf16, #tpu.memory_space<vmem>>, vector<16x384xbf16>
    %cst_45 = arith.constant dense<0.000000e+00> : vector<16x5xf32>
    %98 = tpu.matmul %97, %94, %cst_45 {dimension_numbers = #tpu.dot_dimension_numbers<[1], [1], [0], [0], [0, 0, 1, 0], [], []>} : vector<16x384xbf16>, vector<5x384xbf16>, vector<16x5xf32> -> vector<16x5xf32>
    %99 = vector.extract_strided_slice %96 {offsets = [0, 0], sizes = [5, 1], strides = [1, 1]} : vector<5x128xf32> to vector<5x1xf32>
    %100 = vector.extract_strided_slice %98 {offsets = [0, 0], sizes = [1, 5], strides = [1, 1]} : vector<16x5xf32> to vector<1x5xf32>
    %101 = vector.extract_strided_slice %94 {offsets = [0, 0], sizes = [5, 128], strides = [1, 1]} : vector<5x384xbf16> to vector<5x128xbf16>
    %102 = vector.broadcast %99 : vector<5x1xf32> to vector<5x5xf32>
    %103 = vector.broadcast %100 : vector<1x5xf32> to vector<5x5xf32>
    %104 = arith.addf %102, %103 : vector<5x5xf32>
    %cst_46 = arith.constant 0.000000e+00 : f32
    %105 = vector.broadcast %cst_46 : f32 to vector<5x5xf32>
    %106 = arith.cmpf ogt, %104, %105 : vector<5x5xf32>
    %cst_47 = arith.constant 2.000000e-01 : f32
    %107 = vector.broadcast %cst_47 : f32 to vector<5x5xf32>
    %108 = arith.mulf %107, %104 : vector<5x5xf32>
    %109 = arith.select %106, %104, %108 : vector<5x5xi1>, vector<5x5xf32>
    %cst_48 = arith.constant -9.000000e+15 : f32
    %110 = vector.broadcast %cst_48 : f32 to vector<5x5xf32>
    %111 = arith.select %90, %109, %110 : vector<5x5xi1>, vector<5x5xf32>
    %cst_49 = arith.constant dense<0xFF800000> : vector<5xf32>
    %112 = vector.multi_reduction <maximumf>, %111, %cst_49 [1] : vector<5x5xf32> to vector<5xf32>
    %113 = vector.shape_cast %112 : vector<5xf32> to vector<5x1xf32>
    %114 = vector.broadcast %113 : vector<5x1xf32> to vector<5x5xf32>
    %115 = arith.subf %111, %114 : vector<5x5xf32>
    %116 = math.exp %115 : vector<5x5xf32>
    %cst_50 = arith.constant dense<0.000000e+00> : vector<5xf32>
    %117 = vector.multi_reduction <add>, %116, %cst_50 [1] : vector<5x5xf32> to vector<5xf32>
    %118 = vector.shape_cast %117 : vector<5xf32> to vector<5x1xf32>
    %119 = tpu.reciprocal %118 {approx = true} : vector<5x1xf32> -> vector<5x1xf32>
    %120 = vector.broadcast %119 : vector<5x1xf32> to vector<5x5xf32>
    %121 = arith.mulf %116, %120 : vector<5x5xf32>
    %122 = arith.truncf %121 : vector<5x5xf32> to vector<5x5xbf16>
    %cst_51 = arith.constant dense<0.000000e+00> : vector<5x128xf32>
    %123 = tpu.matmul %122, %101, %cst_51 {dimension_numbers = #tpu.dot_dimension_numbers<[1], [0], [0], [1], [0, 0, 1, 1], [], []>} : vector<5x5xbf16>, vector<5x128xbf16>, vector<5x128xf32> -> vector<5x128xf32>
    %cst_52 = arith.constant 0.000000e+00 : f32
    %124 = vector.broadcast %cst_52 : f32 to vector<5x128xf32>
    %125 = arith.cmpf ogt, %123, %124 : vector<5x128xf32>
    %cst_53 = arith.constant 0.000000e+00 : f32
    %126 = vector.broadcast %cst_53 : f32 to vector<5x128xf32>
    %127 = arith.minimumf %123, %126 : vector<5x128xf32>
    %128 = math.exp %127 : vector<5x128xf32>
    %cst_54 = arith.constant 1.000000e+00 : f32
    %129 = vector.broadcast %cst_54 : f32 to vector<5x128xf32>
    %130 = arith.subf %128, %129 : vector<5x128xf32>
    %131 = arith.select %125, %123, %130 : vector<5x128xi1>, vector<5x128xf32>
    %132 = arith.truncf %131 : vector<5x128xf32> to vector<5x128xbf16>
    %c0_55 = arith.constant 0 : index
    %c0_56 = arith.constant 0 : index
    %133 = vector.load %arg8[%c0_55, %c0_56] : memref<5x384xbf16, #tpu.memory_space<vmem>>, vector<5x128xbf16>
    tpu.vector_store %arg8[%c0_55, %c0_56], %132 {strides = array<i32>} : memref<5x384xbf16, #tpu.memory_space<vmem>>, vector<5x128xbf16>,
    %134 = vector.extract_strided_slice %96 {offsets = [0, 1], sizes = [5, 1], strides = [1, 1]} : vector<5x128xf32> to vector<5x1xf32>
    %135 = vector.extract_strided_slice %98 {offsets = [1, 0], sizes = [1, 5], strides = [1, 1]} : vector<16x5xf32> to vector<1x5xf32>
    %136 = vector.extract_strided_slice %94 {offsets = [0, 128], sizes = [5, 128], strides = [1, 1]} : vector<5x384xbf16> to vector<5x128xbf16>
    %137 = vector.broadcast %134 : vector<5x1xf32> to vector<5x5xf32>
    %138 = vector.broadcast %135 : vector<1x5xf32> to vector<5x5xf32>
    %139 = arith.addf %137, %138 : vector<5x5xf32>
    %cst_57 = arith.constant 0.000000e+00 : f32
    %140 = vector.broadcast %cst_57 : f32 to vector<5x5xf32>
    %141 = arith.cmpf ogt, %139, %140 : vector<5x5xf32>
    %cst_58 = arith.constant 2.000000e-01 : f32
    %142 = vector.broadcast %cst_58 : f32 to vector<5x5xf32>
    %143 = arith.mulf %142, %139 : vector<5x5xf32>
    %144 = arith.select %141, %139, %143 : vector<5x5xi1>, vector<5x5xf32>
    %cst_59 = arith.constant -9.000000e+15 : f32
    %145 = vector.broadcast %cst_59 : f32 to vector<5x5xf32>
    %146 = arith.select %90, %144, %145 : vector<5x5xi1>, vector<5x5xf32>
    %cst_60 = arith.constant dense<0xFF800000> : vector<5xf32>
    %147 = vector.multi_reduction <maximumf>, %146, %cst_60 [1] : vector<5x5xf32> to vector<5xf32>
    %148 = vector.shape_cast %147 : vector<5xf32> to vector<5x1xf32>
    %149 = vector.broadcast %148 : vector<5x1xf32> to vector<5x5xf32>
    %150 = arith.subf %146, %149 : vector<5x5xf32>
    %151 = math.exp %150 : vector<5x5xf32>
    %cst_61 = arith.constant dense<0.000000e+00> : vector<5xf32>
    %152 = vector.multi_reduction <add>, %151, %cst_61 [1] : vector<5x5xf32> to vector<5xf32>
    %153 = vector.shape_cast %152 : vector<5xf32> to vector<5x1xf32>
    %154 = tpu.reciprocal %153 {approx = true} : vector<5x1xf32> -> vector<5x1xf32>
    %155 = vector.broadcast %154 : vector<5x1xf32> to vector<5x5xf32>
    %156 = arith.mulf %151, %155 : vector<5x5xf32>
    %157 = arith.truncf %156 : vector<5x5xf32> to vector<5x5xbf16>
    %cst_62 = arith.constant dense<0.000000e+00> : vector<5x128xf32>
    %158 = tpu.matmul %157, %136, %cst_62 {dimension_numbers = #tpu.dot_dimension_numbers<[1], [0], [0], [1], [0, 0, 1, 1], [], []>} : vector<5x5xbf16>, vector<5x128xbf16>, vector<5x128xf32> -> vector<5x128xf32>
    %cst_63 = arith.constant 0.000000e+00 : f32
    %159 = vector.broadcast %cst_63 : f32 to vector<5x128xf32>
    %160 = arith.cmpf ogt, %158, %159 : vector<5x128xf32>
    %cst_64 = arith.constant 0.000000e+00 : f32
    %161 = vector.broadcast %cst_64 : f32 to vector<5x128xf32>
    %162 = arith.minimumf %158, %161 : vector<5x128xf32>
    %163 = math.exp %162 : vector<5x128xf32>
    %cst_65 = arith.constant 1.000000e+00 : f32
    %164 = vector.broadcast %cst_65 : f32 to vector<5x128xf32>
    %165 = arith.subf %163, %164 : vector<5x128xf32>
    %166 = arith.select %160, %158, %165 : vector<5x128xi1>, vector<5x128xf32>
    %167 = arith.truncf %166 : vector<5x128xf32> to vector<5x128xbf16>
    %c0_66 = arith.constant 0 : index
    %c128_67 = arith.constant 128 : index
    %168 = vector.load %arg8[%c0_66, %c128_67] : memref<5x384xbf16, #tpu.memory_space<vmem>>, vector<5x128xbf16>
    tpu.vector_store %arg8[%c0_66, %c128_67], %167 {strides = array<i32>} : memref<5x384xbf16, #tpu.memory_space<vmem>>, vector<5x128xbf16>,
    %169 = vector.extract_strided_slice %96 {offsets = [0, 2], sizes = [5, 1], strides = [1, 1]} : vector<5x128xf32> to vector<5x1xf32>
    %170 = vector.extract_strided_slice %98 {offsets = [2, 0], sizes = [1, 5], strides = [1, 1]} : vector<16x5xf32> to vector<1x5xf32>
    %171 = vector.extract_strided_slice %94 {offsets = [0, 256], sizes = [5, 128], strides = [1, 1]} : vector<5x384xbf16> to vector<5x128xbf16>
    %172 = vector.broadcast %169 : vector<5x1xf32> to vector<5x5xf32>
    %173 = vector.broadcast %170 : vector<1x5xf32> to vector<5x5xf32>
    %174 = arith.addf %172, %173 : vector<5x5xf32>
    %cst_68 = arith.constant 0.000000e+00 : f32
    %175 = vector.broadcast %cst_68 : f32 to vector<5x5xf32>
    %176 = arith.cmpf ogt, %174, %175 : vector<5x5xf32>
    %cst_69 = arith.constant 2.000000e-01 : f32
    %177 = vector.broadcast %cst_69 : f32 to vector<5x5xf32>
    %178 = arith.mulf %177, %174 : vector<5x5xf32>
    %179 = arith.select %176, %174, %178 : vector<5x5xi1>, vector<5x5xf32>
    %cst_70 = arith.constant -9.000000e+15 : f32
    %180 = vector.broadcast %cst_70 : f32 to vector<5x5xf32>
    %181 = arith.select %90, %179, %180 : vector<5x5xi1>, vector<5x5xf32>
    %cst_71 = arith.constant dense<0xFF800000> : vector<5xf32>
    %182 = vector.multi_reduction <maximumf>, %181, %cst_71 [1] : vector<5x5xf32> to vector<5xf32>
    %183 = vector.shape_cast %182 : vector<5xf32> to vector<5x1xf32>
    %184 = vector.broadcast %183 : vector<5x1xf32> to vector<5x5xf32>
    %185 = arith.subf %181, %184 : vector<5x5xf32>
    %186 = math.exp %185 : vector<5x5xf32>
    %cst_72 = arith.constant dense<0.000000e+00> : vector<5xf32>
    %187 = vector.multi_reduction <add>, %186, %cst_72 [1] : vector<5x5xf32> to vector<5xf32>
    %188 = vector.shape_cast %187 : vector<5xf32> to vector<5x1xf32>
    %189 = tpu.reciprocal %188 {approx = true} : vector<5x1xf32> -> vector<5x1xf32>
    %190 = vector.broadcast %189 : vector<5x1xf32> to vector<5x5xf32>
    %191 = arith.mulf %186, %190 : vector<5x5xf32>
    %192 = arith.truncf %191 : vector<5x5xf32> to vector<5x5xbf16>
    %cst_73 = arith.constant dense<0.000000e+00> : vector<5x128xf32>
    %193 = tpu.matmul %192, %171, %cst_73 {dimension_numbers = #tpu.dot_dimension_numbers<[1], [0], [0], [1], [0, 0, 1, 1], [], []>} : vector<5x5xbf16>, vector<5x128xbf16>, vector<5x128xf32> -> vector<5x128xf32>
    %cst_74 = arith.constant 0.000000e+00 : f32
    %194 = vector.broadcast %cst_74 : f32 to vector<5x128xf32>
    %195 = arith.cmpf ogt, %193, %194 : vector<5x128xf32>
    %cst_75 = arith.constant 0.000000e+00 : f32
    %196 = vector.broadcast %cst_75 : f32 to vector<5x128xf32>
    %197 = arith.minimumf %193, %196 : vector<5x128xf32>
    %198 = math.exp %197 : vector<5x128xf32>
    %cst_76 = arith.constant 1.000000e+00 : f32
    %199 = vector.broadcast %cst_76 : f32 to vector<5x128xf32>
    %200 = arith.subf %198, %199 : vector<5x128xf32>
    %201 = arith.select %195, %193, %200 : vector<5x128xi1>, vector<5x128xf32>
    %202 = arith.truncf %201 : vector<5x128xf32> to vector<5x128xbf16>
    %c0_77 = arith.constant 0 : index
    %c256_78 = arith.constant 256 : index
    %203 = vector.load %arg8[%c0_77, %c256_78] : memref<5x384xbf16, #tpu.memory_space<vmem>>, vector<5x128xbf16>
    tpu.vector_store %arg8[%c0_77, %c256_78], %202 {strides = array<i32>} : memref<5x384xbf16, #tpu.memory_space<vmem>>, vector<5x128xbf16>,
    %c0_79 = arith.constant 0 : index
    %c0_80 = arith.constant 0 : index
    %204 = vector.load %arg8[%c0_79, %c0_80] : memref<5x384xbf16, #tpu.memory_space<vmem>>, vector<5x384xbf16>
    %c128_81 = arith.constant 128 : index
    %c0_82 = arith.constant 0 : index
    %205 = vector.load %arg4[%c128_81, %c0_82] : memref<928x384xbf16, #tpu.memory_space<vmem>>, vector<384x128xbf16>
    %cst_83 = arith.constant dense<0.000000e+00> : vector<5x128xf32>
    %206 = tpu.matmul %204, %205, %cst_83 {dimension_numbers = #tpu.dot_dimension_numbers<[1], [0], [0], [1], [0, 0, 1, 1], [], []>} : vector<5x384xbf16>, vector<384x128xbf16>, vector<5x128xf32> -> vector<5x128xf32>
    %207 = arith.truncf %206 : vector<5x128xf32> to vector<5x128xbf16>
    %208 = vector.extract_strided_slice %0 {offsets = [6, 0], sizes = [1, 128], strides = [1, 1]} : vector<8x128xf32> to vector<1x128xf32>
    %209 = vector.broadcast %208 : vector<1x128xf32> to vector<5x128xf32>
    %210 = arith.mulf %206, %209 : vector<5x128xf32>
    %cst_84 = arith.constant dense<0.000000e+00> : vector<5xf32>
    %211 = vector.multi_reduction <add>, %210, %cst_84 [1] : vector<5x128xf32> to vector<5xf32>
    %212 = vector.shape_cast %211 : vector<5xf32> to vector<5x1xf32>
    %c912 = arith.constant 912 : index
    %c0_85 = arith.constant 0 : index
    %213 = vector.load %arg4[%c912, %c0_85] : memref<928x384xbf16, #tpu.memory_space<vmem>>, vector<16x128xbf16>
    %cst_86 = arith.constant dense<0.000000e+00> : vector<16x5xf32>
    %214 = tpu.matmul %213, %207, %cst_86 {dimension_numbers = #tpu.dot_dimension_numbers<[1], [1], [0], [0], [0, 0, 1, 0], [], []>} : vector<16x128xbf16>, vector<5x128xbf16>, vector<16x5xf32> -> vector<16x5xf32>
    %215 = vector.extract_strided_slice %214 {offsets = [0, 0], sizes = [1, 5], strides = [1, 1]} : vector<16x5xf32> to vector<1x5xf32>
    %216 = vector.broadcast %212 : vector<5x1xf32> to vector<5x5xf32>
    %217 = vector.broadcast %215 : vector<1x5xf32> to vector<5x5xf32>
    %218 = arith.addf %216, %217 : vector<5x5xf32>
    %cst_87 = arith.constant 0.000000e+00 : f32
    %219 = vector.broadcast %cst_87 : f32 to vector<5x5xf32>
    %220 = arith.cmpf ogt, %218, %219 : vector<5x5xf32>
    %cst_88 = arith.constant 2.000000e-01 : f32
    %221 = vector.broadcast %cst_88 : f32 to vector<5x5xf32>
    %222 = arith.mulf %221, %218 : vector<5x5xf32>
    %223 = arith.select %220, %218, %222 : vector<5x5xi1>, vector<5x5xf32>
    %cst_89 = arith.constant -9.000000e+15 : f32
    %224 = vector.broadcast %cst_89 : f32 to vector<5x5xf32>
    %225 = arith.select %90, %223, %224 : vector<5x5xi1>, vector<5x5xf32>
    %cst_90 = arith.constant dense<0xFF800000> : vector<5xf32>
    %226 = vector.multi_reduction <maximumf>, %225, %cst_90 [1] : vector<5x5xf32> to vector<5xf32>
    %227 = vector.shape_cast %226 : vector<5xf32> to vector<5x1xf32>
    %228 = vector.broadcast %227 : vector<5x1xf32> to vector<5x5xf32>
    %229 = arith.subf %225, %228 : vector<5x5xf32>
    %230 = math.exp %229 : vector<5x5xf32>
    %cst_91 = arith.constant dense<0.000000e+00> : vector<5xf32>
    %231 = vector.multi_reduction <add>, %230, %cst_91 [1] : vector<5x5xf32> to vector<5xf32>
    %232 = vector.shape_cast %231 : vector<5xf32> to vector<5x1xf32>
    %233 = tpu.reciprocal %232 {approx = true} : vector<5x1xf32> -> vector<5x1xf32>
    %234 = vector.broadcast %233 : vector<5x1xf32> to vector<5x5xf32>
    %235 = arith.mulf %230, %234 : vector<5x5xf32>
    %236 = arith.truncf %235 : vector<5x5xf32> to vector<5x5xbf16>
    %cst_92 = arith.constant dense<0.000000e+00> : vector<5x128xf32>
    %237 = tpu.matmul %236, %207, %cst_92 {dimension_numbers = #tpu.dot_dimension_numbers<[1], [0], [0], [1], [0, 0, 1, 1], [], []>} : vector<5x5xbf16>, vector<5x128xbf16>, vector<5x128xf32> -> vector<5x128xf32>
    %238 = vector.extract_strided_slice %237 {offsets = [0, 0], sizes = [5, 6], strides = [1, 1]} : vector<5x128xf32> to vector<5x6xf32>
    %cst_93 = arith.constant 0.000000e+00 : f32
    %239 = vector.broadcast %cst_93 : f32 to vector<5x6xf32>
    %240 = arith.cmpf ogt, %238, %239 : vector<5x6xf32>
    %cst_94 = arith.constant 0.000000e+00 : f32
    %241 = vector.broadcast %cst_94 : f32 to vector<5x6xf32>
    %242 = arith.minimumf %238, %241 : vector<5x6xf32>
    %243 = math.exp %242 : vector<5x6xf32>
    %cst_95 = arith.constant 1.000000e+00 : f32
    %244 = vector.broadcast %cst_95 : f32 to vector<5x6xf32>
    %245 = arith.subf %243, %244 : vector<5x6xf32>
    %246 = arith.select %240, %238, %245 : vector<5x6xi1>, vector<5x6xf32>
    %cst_96 = arith.constant dense<0xFF800000> : vector<5xf32>
    %247 = vector.multi_reduction <maximumf>, %246, %cst_96 [1] : vector<5x6xf32> to vector<5xf32>
    %248 = vector.shape_cast %247 : vector<5xf32> to vector<5x1xf32>
    %249 = vector.broadcast %248 : vector<5x1xf32> to vector<5x6xf32>
    %250 = arith.subf %246, %249 : vector<5x6xf32>
    %251 = math.exp %250 : vector<5x6xf32>
    %cst_97 = arith.constant dense<0.000000e+00> : vector<5xf32>
    %252 = vector.multi_reduction <add>, %251, %cst_97 [1] : vector<5x6xf32> to vector<5xf32>
    %253 = vector.shape_cast %252 : vector<5xf32> to vector<5x1xf32>
    %254 = math.log %253 : vector<5x1xf32>
    %255 = vector.broadcast %254 : vector<5x1xf32> to vector<5x6xf32>
    %256 = arith.subf %250, %255 : vector<5x6xf32>
    %c0_98 = arith.constant 0 : index
    %c0_99 = arith.constant 0 : index
    %257 = vector.load %arg6[%c0_98, %c0_99] : memref<5x6xf32, #tpu.memory_space<vmem>>, vector<5x6xf32>
    tpu.vector_store %arg6[%c0_98, %c0_99], %256 {strides = array<i32>} : memref<5x6xf32, #tpu.memory_space<vmem>>, vector<5x6xf32>,
    return
  }
}

</mosaic_0001>

<llo_original>
// kernel: grm_forward.1
$region0: #{grm_forward.1}
  #allocation0 [shape = 'u32[]', space=smem, size = 0x4, offset = 0x4, fixed_abs, tag = 'smem constant byte address 0x4 - core index']
  #allocation1 [shape = 'u32[144,128]{1,0:T(1,128)}', space=vmem, size = 0x12000, scoped, tag = 'internal scratch']
  #allocation2 [shape = 'bf16[5,384]{1,0:T(8,128)(2,1)}', space=vmem, size = 0x1800, scoped, tag = 'scratch operand']
  %s0 = inlined_call_operand.vmem [shape: f32[5,192], index: 0, kind: input, shape index: {}]
  %s1 = inlined_call_operand.vmem [shape: f32[1,128], index: 1, kind: input, shape index: {}]
  %s2 = inlined_call_operand.vmem [shape: f32[5,5], index: 2, kind: input, shape index: {}]
  %s3 = inlined_call_operand.hbm [shape: bf16[832,128], index: 3, kind: input, shape index: {}]
  %s4 = inlined_call_operand.hbm [shape: bf16[928,384], index: 4, kind: input, shape index: {}]
  %s5 = inlined_call_operand.hbm [shape: f32[264,128], index: 5, kind: input, shape index: {}]
  %s6 = inlined_call_operand.hbm [shape: f32[5,6], index: 6, kind: output, shape index: {0}]
  %s7 = inlined_call_operand.hbm [shape: f32[1,1], index: 7, kind: output, shape index: {1}]
  %8 = xla_tuple %s6, %s7
  %s9 = sld [smem:[#allocation0]]
  $region54: #{grm_forward.1} parent=0
    _
  %s11 = ssub.s32 1, %s9
  %s12 = scalar_select 0, %s11, %s9
  $region1: #{grm_forward.1} parent=0
    #allocation3 [shape = 'u8[212992]{0}', space=vmem, size = 0x34000, scoped, tag = 'input window, operand 3, single buffered']
    #allocation4 [shape = 's32[1]{0}', space=sflag, size = 0x4, scoped, tag = 'scoped memory for grm_forward.1']
    #allocation5 [shape = 's32[1]{0}', space=sflag, size = 0x4, scoped, tag = 'scoped memory for grm_forward.1']
    #allocation6 [shape = 'u8[712704]{0}', space=vmem, size = 0xae000, scoped, tag = 'input window, operand 4, single buffered']
    #allocation7 [shape = 's32[1]{0}', space=sflag, size = 0x4, scoped, tag = 'scoped memory for grm_forward.1']
    #allocation8 [shape = 'u8[135168]{0}', space=vmem, size = 0x21000, scoped, tag = 'input window, operand 5, single buffered']
    #allocation9 [shape = 'u8[4096]{0}', space=vmem, size = 0x1000, scoped, tag = 'output window, operand 0, single buffered']
    #allocation10 [shape = 'u8[512]{0}', space=vmem, size = 0x400, scoped, tag = 'output window, operand 1, single buffered']
    #allocation11 [shape = 's32[1]{0}', space=sflag, size = 0x4, scoped, tag = 'scoped memory for grm_forward.1']
    %13 = vsyncpa [#allocation4], 0
    %14 = vsyncpa [#allocation7], 0
    %15 = vsyncpa [#allocation5], 0
    %16 = vsyncpa [#allocation11], 0
    // Predicated region
    $region2: #{grm_forward.1} parent=1 // pred_check
      _
    $region3: #{grm_forward.1} parent=1 // pred_check_branch
      %18 = sbr.rel (0) target = $region5
    $region4: #{grm_forward.1} parent=1 // pred_region
      _
    $region5: #{grm_forward.1} parent=1 // pred_fallthru
      _
    // Predicated region
    $region6: #{grm_forward.1} parent=1 // pred_check
      _
    $region7: #{grm_forward.1} parent=1 // pred_check_branch
      %20 = sbr.rel (0) target = $region9
    $region8: #{grm_forward.1} parent=1 // pred_region
      _
    $region9: #{grm_forward.1} parent=1 // pred_fallthru
      _
    // Predicated region
    $region10: #{grm_forward.1} parent=1 // pred_check
      _
    $region11: #{grm_forward.1} parent=1 // pred_check_branch
      %22 = sbr.rel (0) target = $region13
    $region12: #{grm_forward.1} parent=1 // pred_region
      _
    $region13: #{grm_forward.1} parent=1 // pred_fallthru
      _
    // Predicated region
    $region14: #{grm_forward.1} parent=1 // pred_check
      _
    $region15: #{grm_forward.1} parent=1 // pred_check_branch
      %24 = sbr.rel (0) target = $region17
    $region16: #{grm_forward.1} parent=1 // pred_region
      %s26 = ssub.s32 6656, 6656
      %27 = vsyncadd [#allocation4], %s26
      %s28 = sshll.u32 [#allocation3], 4
      %s29 = int_to_ptr.vmem [resolvable:$true] %s28
      %34 = dma.hbm_to_vmem [thread:$0]  %s3, 6656, %s29, [#allocation4], 64, 64, 4
    $region17: #{grm_forward.1} parent=1 // pred_fallthru
      _
    // Predicated region
    $region18: #{grm_forward.1} parent=1 // pred_check
      _
    $region19: #{grm_forward.1} parent=1 // pred_check_branch
      %36 = sbr.rel (0) target = $region21
    $region20: #{grm_forward.1} parent=1 // pred_region
      %s38 = ssub.s32 22272, 22272
      %39 = vsyncadd [#allocation7], %s38
      %s40 = sshll.u32 [#allocation6], 4
      %s41 = int_to_ptr.vmem [resolvable:$true] %s40
      %46 = dma.hbm_to_vmem [thread:$0]  %s4, 22272, %s41, [#allocation7], 192, 192, 12
    $region21: #{grm_forward.1} parent=1 // pred_fallthru
      _
    // Predicated region
    $region22: #{grm_forward.1} parent=1 // pred_check
      _
    $region23: #{grm_forward.1} parent=1 // pred_check_branch
      %48 = sbr.rel (0) target = $region25
    $region24: #{grm_forward.1} parent=1 // pred_region
      %s50 = ssub.s32 4224, 4224
      %51 = vsyncadd [#allocation7], %s50
      %s52 = sshll.u32 [#allocation8], 4
      %s53 = int_to_ptr.vmem [resolvable:$true] %s52
      %58 = dma.hbm_to_vmem [thread:$0]  %s5, 4224, %s53, [#allocation7], 128, 128, 8
    $region25: #{grm_forward.1} parent=1 // pred_fallthru
      _
    // Predicated region
    $region26: #{grm_forward.1} parent=1 // pred_check
      _
    $region27: #{grm_forward.1} parent=1 // pred_check_branch
      %60 = sbr.rel (0) target = $region29
    $region28: #{grm_forward.1} parent=1 // pred_region
      %61 = dma.done [#allocation4], 6656
    $region29: #{grm_forward.1} parent=1 // pred_fallthru
      _
    // Predicated region
    $region30: #{grm_forward.1} parent=1 // pred_check
      _
    $region31: #{grm_forward.1} parent=1 // pred_check_branch
      %63 = sbr.rel (0) target = $region33
    $region32: #{grm_forward.1} parent=1 // pred_region
      %64 = dma.done [#allocation7], 22272
    $region33: #{grm_forward.1} parent=1 // pred_fallthru
      _
    // Predicated region
    $region34: #{grm_forward.1} parent=1 // pred_check
      _
    $region35: #{grm_forward.1} parent=1 // pred_check_branch
      %66 = sbr.rel (0) target = $region37
    $region36: #{grm_forward.1} parent=1 // pred_region
      %67 = dma.done [#allocation7], 4224
    $region37: #{grm_forward.1} parent=1 // pred_fallthru
      _
    %v69 = vld [vmem:[#allocation8 + $0x100] sm:$0xff]
    %v70 = vld [vmem:[%s0] sm:$0x1f]
    %v71 = vld [vmem:[%s0 + $0x8] sm:$0x1f]
    %v72 = vld [vmem:[#allocation3] sm:$0xf]
    %v73 = vld [vmem:[#allocation3 + $0x4] sm:$0xf]
    %v74 = vld [vmem:[#allocation3 + $0x8] sm:$0xf]
    %v75 = vld [vmem:[#allocation3 + $0xc] sm:$0xf]
    %v76 = vld [vmem:[#allocation3 + $0x10] sm:$0xf]
    %v77 = vld [vmem:[#allocation3 + $0x14] sm:$0xf]
    %v78 = vld [vmem:[#allocation3 + $0x18] sm:$0xf]
    %v79 = vld [vmem:[#allocation3 + $0x1c] sm:$0xf]
    %v80 = vld [vmem:[#allocation3 + $0x20] sm:$0xf]
    %v81 = vld [vmem:[#allocation3 + $0x24] sm:$0xf]
    %v82 = vld [vmem:[#allocation3 + $0x28] sm:$0xf]
    %v83 = vld [vmem:[#allocation3 + $0x2c] sm:$0xf]
    %v84 = vld [vmem:[#allocation3 + $0x30] sm:$0xf]
    %v85 = vld [vmem:[#allocation3 + $0x34] sm:$0xf]
    %v86 = vld [vmem:[#allocation3 + $0x38] sm:$0xf]
    %v87 = vld [vmem:[#allocation3 + $0x3c] sm:$0xf]
    %v88 = vld [vmem:[#allocation3 + $0x40] sm:$0xf]
    %v89 = vld [vmem:[#allocation3 + $0x44] sm:$0xf]
    %v90 = vld [vmem:[#allocation3 + $0x48] sm:$0xf]
    %v91 = vld [vmem:[#allocation3 + $0x4c] sm:$0xf]
    %v92 = vld [vmem:[#allocation3 + $0x50] sm:$0xf]
    %v93 = vld [vmem:[#allocation3 + $0x54] sm:$0xf]
    %v94 = vld [vmem:[#allocation3 + $0x58] sm:$0xf]
    %v95 = vld [vmem:[#allocation3 + $0x5c] sm:$0xf]
    %v96 = vpack.c.bf16 %v70, %v70
    %v97 = vpack.c.bf16 %v71, %v71
    %v98 = vlaneseq
    %v99 = vshrl.u32 %v98, 7
    %v100 = vsub.s32 0, %v99
    %v101 = vrot.slane %v69, %v100
    %v126 = vunpack.c.l.b16 %v72
    %v127 = vunpack.c.l.b16 %v73
    %v128 = vunpack.c.l.b16 %v74
    %v129 = vunpack.c.l.b16 %v75
    %v130 = vunpack.c.l.b16 %v76
    %v131 = vunpack.c.l.b16 %v77
    %v132 = vunpack.c.l.b16 %v78
    %v133 = vunpack.c.l.b16 %v79
    %v134 = vunpack.c.l.b16 %v80
    %v135 = vunpack.c.l.b16 %v81
    %v136 = vunpack.c.l.b16 %v82
    %v137 = vunpack.c.l.b16 %v83
    %v138 = vunpack.c.l.b16 %v84
    %v139 = vunpack.c.l.b16 %v85
    %v140 = vunpack.c.l.b16 %v86
    %v141 = vunpack.c.l.b16 %v87
    %v142 = vunpack.c.l.b16 %v88
    %v143 = vunpack.c.l.b16 %v89
    %v144 = vunpack.c.l.b16 %v90
    %v145 = vunpack.c.l.b16 %v91
    %v146 = vunpack.c.l.b16 %v92
    %v147 = vunpack.c.l.b16 %v93
    %v148 = vunpack.c.l.b16 %v94
    %v149 = vunpack.c.l.b16 %v95
    %v150 = vpack.c.b16 %v127, %v126
    %v151 = vpack.c.b16 %v129, %v128
    %v152 = vpack.c.b16 %v131, %v130
    %v153 = vpack.c.b16 %v133, %v132
    %v154 = vpack.c.b16 %v135, %v134
    %v155 = vpack.c.b16 %v137, %v136
    %v156 = vpack.c.b16 %v139, %v138
    %v157 = vpack.c.b16 %v141, %v140
    %v158 = vpack.c.b16 %v143, %v142
    %v159 = vpack.c.b16 %v145, %v144
    %v160 = vpack.c.b16 %v147, %v146
    %v161 = vpack.c.b16 %v149, %v148
    %vm174 = vcmask 523264
    %v176 = vsel %vm174, %v97, 0
    %178 = vmatprep.subr.bf16.mxu0 0
    %179 = vmatpush1.bf16.msra.mxu0 %v150
    %180 = vmatprep.subr.bf16.mxu0 0
    %181 = vmatpush1.bf16.msra.mxu0 %v151
    %182 = vmatprep.subr.bf16.mxu0 0
    %183 = vmatpush1.bf16.msra.mxu0 %v152
    %184 = vmatprep.subr.bf16.mxu0 0
    %185 = vmatpush1.bf16.msra.mxu0 %v153
    %186 = vmatprep.subr.bf16.mxu0 0
    %187 = vmatpush1.bf16.msra.mxu0 %v154
    %188 = vmatprep.subr.bf16.mxu0 0
    %189 = vmatpush1.bf16.msra.mxu0 %v155
    %190 = vmatprep.subr.bf16.mxu0 0
    %191 = vmatpush1.bf16.msra.mxu0 %v156
    %192 = vmatprep.subr.bf16.mxu0 0
    %193 = vmatpush1.bf16.msra.mxu0 %v157
    %194 = vmatprep.subr.bf16.mxu0 0
    %195 = vmatpush1.bf16.msra.mxu0 %v158
    %196 = vmatprep.subr.bf16.mxu0 0
    %197 = vmatpush1.bf16.msra.mxu0 %v159
    %198 = vmatprep.subr.bf16.mxu0 0
    %199 = vmatpush1.bf16.msra.mxu0 %v160
    %200 = vmatprep.subr.bf16.mxu0 0
    %201 = vmatpush1.bf16.msra.mxu0 %v161
    %202 = vmatprep.subr.bf16.mxu0 0
    %203 = vmatpush1.bf16.msra.mxu0 0
    %204 = vmatprep.subr.bf16.mxu0 0
    %205 = vmatpush1.bf16.msra.mxu0 0
    %206 = vmatprep.subr.bf16.mxu0 0
    %207 = vmatpush1.bf16.msra.mxu0 0
    %208 = vmatprep.subr.bf16.mxu0 0
    %209 = vmatpush1.bf16.msra.mxu0 0
    %210 = vmatprep.mubr.bf16.mxu0 %v176
    %211 = vmatmul.mubr.bf16.gmra.mrb[0].mxu0 %v96
    %v212 = vpop.f32.mrb[0].mxu0
    %v213 = vadd.f32 %v101, %v212
    %v214 = vpop.f32.mrb[0].mxu0
    %v215 = vpop.f32.mrb[0].mxu0
    %v216 = vpop.f32.mrb[0].mxu0
    %217 = vdwg.mxu0
    %v218 = vmax.f32 %v213, 0.0
    %v219 = vld [vmem:[#allocation3 + $0x60] sm:$0xf]
    %v220 = vld [vmem:[#allocation3 + $0x64] sm:$0xf]
    %v221 = vld [vmem:[#allocation3 + $0x68] sm:$0xf]
    %v222 = vld [vmem:[#allocation3 + $0x6c] sm:$0xf]
    %v223 = vld [vmem:[#allocation3 + $0x70] sm:$0xf]
    %v224 = vld [vmem:[#allocation3 + $0x74] sm:$0xf]
    %v225 = vld [vmem:[#allocation3 + $0x78] sm:$0xf]
    %v226 = vld [vmem:[#allocation3 + $0x7c] sm:$0xf]
    %v227 = vld [vmem:[#allocation3 + $0x80] sm:$0xf]
    %v228 = vld [vmem:[#allocation3 + $0x84] sm:$0xf]
    %v229 = vld [vmem:[#allocation3 + $0x88] sm:$0xf]
    %v230 = vld [vmem:[#allocation3 + $0x8c] sm:$0xf]
    %v231 = vld [vmem:[#allocation3 + $0x90] sm:$0xf]
    %v232 = vld [vmem:[#allocation3 + $0x94] sm:$0xf]
    %v233 = vld [vmem:[#allocation3 + $0x98] sm:$0xf]
    %v234 = vld [vmem:[#allocation3 + $0x9c] sm:$0xf]
    %v235 = vpack.c.bf16 %v218, %v218
    %v236 = vlaneseq
    %v237 = vshrl.u32 %v236, 7
    %v238 = vsub.s32 1, %v237
    %v239 = vrot.slane %v69, %v238
    %v256 = vunpack.c.l.b16 %v219
    %v257 = vunpack.c.l.b16 %v220
    %v258 = vunpack.c.l.b16 %v221
    %v259 = vunpack.c.l.b16 %v222
    %v260 = vunpack.c.l.b16 %v223
    %v261 = vunpack.c.l.b16 %v224
    %v262 = vunpack.c.l.b16 %v225
    %v263 = vunpack.c.l.b16 %v226
    %v264 = vunpack.c.l.b16 %v227
    %v265 = vunpack.c.l.b16 %v228
    %v266 = vunpack.c.l.b16 %v229
    %v267 = vunpack.c.l.b16 %v230
    %v268 = vunpack.c.l.b16 %v231
    %v269 = vunpack.c.l.b16 %v232
    %v270 = vunpack.c.l.b16 %v233
    %v271 = vunpack.c.l.b16 %v234
    %v272 = vpack.c.b16 %v257, %v256
    %v273 = vpack.c.b16 %v259, %v258
    %v274 = vpack.c.b16 %v261, %v260
    %v275 = vpack.c.b16 %v263, %v262
    %v276 = vpack.c.b16 %v265, %v264
    %v277 = vpack.c.b16 %v267, %v266
    %v278 = vpack.c.b16 %v269, %v268
    %v279 = vpack.c.b16 %v271, %v270
    %288 = vmatprep.subr.bf16.mxu0 0
    %289 = vmatpush1.bf16.msra.mxu0 %v272
    %290 = vmatprep.subr.bf16.mxu0 0
    %291 = vmatpush1.bf16.msra.mxu0 %v273
    %292 = vmatprep.subr.bf16.mxu0 0
    %293 = vmatpush1.bf16.msra.mxu0 %v274
    %294 = vmatprep.subr.bf16.mxu0 0
    %295 = vmatpush1.bf16.msra.mxu0 %v275
    %296 = vmatprep.subr.bf16.mxu0 0
    %297 = vmatpush1.bf16.msra.mxu0 %v276
    %298 = vmatprep.subr.bf16.mxu0 0
    %299 = vmatpush1.bf16.msra.mxu0 %v277
    %300 = vmatprep.subr.bf16.mxu0 0
    %301 = vmatpush1.bf16.msra.mxu0 %v278
    %302 = vmatprep.subr.bf16.mxu0 0
    %303 = vmatpush1.bf16.msra.mxu0 %v279
    %304 = vmatprep.subr.bf16.mxu0 0
    %305 = vmatpush1.bf16.msra.mxu0 0
    %306 = vmatprep.subr.bf16.mxu0 0
    %307 = vmatpush1.bf16.msra.mxu0 0
    %308 = vmatprep.subr.bf16.mxu0 0
    %309 = vmatpush1.bf16.msra.mxu0 0
    %310 = vmatprep.subr.bf16.mxu0 0
    %311 = vmatpush1.bf16.msra.mxu0 0
    %312 = vmatprep.subr.bf16.mxu0 0
    %313 = vmatpush1.bf16.msra.mxu0 0
    %314 = vmatprep.subr.bf16.mxu0 0
    %315 = vmatpush1.bf16.msra.mxu0 0
    %316 = vmatprep.subr.bf16.mxu0 0
    %317 = vmatpush1.bf16.msra.mxu0 0
    %318 = vmatprep.subr.bf16.mxu0 0
    %319 = vmatpush1.bf16.msra.mxu0 0
    %320 = vmatprep.mubr.bf16.mxu0 0
    %321 = vmatmul.mubr.bf16.gmra.mrb[0].mxu0 %v235
    %v322 = vpop.f32.mrb[0].mxu0
    %v323 = vadd.f32 %v239, %v322
    %v324 = vpop.f32.mrb[0].mxu0
    %v325 = vpop.f32.mrb[0].mxu0
    %v326 = vpop.f32.mrb[0].mxu0
    %327 = vdwg.mxu0
    %v328 = vmax.f32 %v323, 0.0
    %v329 = vld [vmem:[%s1] sm:$0x1]
    %v330 = vld [vmem:[#allocation3 + $0xa0] sm:$0xf]
    %v331 = vld [vmem:[#allocation3 + $0xa4] sm:$0xf]
    %v332 = vld [vmem:[#allocation3 + $0xa8] sm:$0xf]
    %v333 = vld [vmem:[#allocation3 + $0xac] sm:$0xf]
    %v334 = vld [vmem:[#allocation3 + $0xb0] sm:$0xf]
    %v335 = vld [vmem:[#allocation3 + $0xb4] sm:$0xf]
    %v336 = vld [vmem:[#allocation3 + $0xb8] sm:$0xf]
    %v337 = vld [vmem:[#allocation3 + $0xbc] sm:$0xf]
    %v338 = vld [vmem:[#allocation3 + $0xc0] sm:$0xf]
    %v339 = vld [vmem:[#allocation3 + $0xc4] sm:$0xf]
    %v340 = vld [vmem:[#allocation3 + $0xc8] sm:$0xf]
    %v341 = vld [vmem:[#allocation3 + $0xcc] sm:$0xf]
    %v342 = vld [vmem:[#allocation3 + $0xd0] sm:$0xf]
    %v343 = vld [vmem:[#allocation3 + $0xd4] sm:$0xf]
    %v344 = vld [vmem:[#allocation3 + $0xd8] sm:$0xf]
    %v345 = vld [vmem:[#allocation3 + $0xdc] sm:$0xf]
    %v346 = vpack.c.bf16 %v328, %v328
    %v347 = vld [vmem:[#allocation3 + $0xe0] sm:$0xf]
    %v348 = vld [vmem:[#allocation3 + $0xe4] sm:$0xf]
    %v349 = vld [vmem:[#allocation3 + $0xe8] sm:$0xf]
    %v350 = vld [vmem:[#allocation3 + $0xec] sm:$0xf]
    %v351 = vld [vmem:[#allocation3 + $0xf0] sm:$0xf]
    %v352 = vld [vmem:[#allocation3 + $0xf4] sm:$0xf]
    %v353 = vld [vmem:[#allocation3 + $0xf8] sm:$0xf]
    %v354 = vld [vmem:[#allocation3 + $0xfc] sm:$0xf]
    %v355 = vld [vmem:[#allocation3 + $0x100] sm:$0xf]
    %v356 = vld [vmem:[#allocation3 + $0x104] sm:$0xf]
    %v357 = vld [vmem:[#allocation3 + $0x108] sm:$0xf]
    %v358 = vld [vmem:[#allocation3 + $0x10c] sm:$0xf]
    %v359 = vld [vmem:[#allocation3 + $0x110] sm:$0xf]
    %v360 = vld [vmem:[#allocation3 + $0x114] sm:$0xf]
    %v361 = vld [vmem:[#allocation3 + $0x118] sm:$0xf]
    %v362 = vld [vmem:[#allocation3 + $0x11c] sm:$0xf]
    %v363 = vpack.c.bf16 %v329, %v329
    %v380 = vunpack.c.l.b16 %v347
    %v381 = vunpack.c.l.b16 %v348
    %v382 = vunpack.c.l.b16 %v349
    %v383 = vunpack.c.l.b16 %v350
    %v384 = vunpack.c.l.b16 %v351
    %v385 = vunpack.c.l.b16 %v352
    %v386 = vunpack.c.l.b16 %v353
    %v387 = vunpack.c.l.b16 %v354
    %v388 = vunpack.c.l.b16 %v355
    %v389 = vunpack.c.l.b16 %v356
    %v390 = vunpack.c.l.b16 %v357
    %v391 = vunpack.c.l.b16 %v358
    %v392 = vunpack.c.l.b16 %v359
    %v393 = vunpack.c.l.b16 %v360
    %v394 = vunpack.c.l.b16 %v361
    %v395 = vunpack.c.l.b16 %v362
    %v396 = vpack.c.b16 %v381, %v380
    %v397 = vpack.c.b16 %v383, %v382
    %v398 = vpack.c.b16 %v385, %v384
    %v399 = vpack.c.b16 %v387, %v386
    %v400 = vpack.c.b16 %v389, %v388
    %v401 = vpack.c.b16 %v391, %v390
    %v402 = vpack.c.b16 %v393, %v392
    %v403 = vpack.c.b16 %v395, %v394
    %412 = vmatprep.subr.bf16.mxu0 0
    %413 = vmatpush1.bf16.msra.mxu0 %v396
    %414 = vmatprep.subr.bf16.mxu0 0
    %415 = vmatpush1.bf16.msra.mxu0 %v397
    %416 = vmatprep.subr.bf16.mxu0 0
    %417 = vmatpush1.bf16.msra.mxu0 %v398
    %418 = vmatprep.subr.bf16.mxu0 0
    %419 = vmatpush1.bf16.msra.mxu0 %v399
    %420 = vmatprep.subr.bf16.mxu0 0
    %421 = vmatpush1.bf16.msra.mxu0 %v400
    %422 = vmatprep.subr.bf16.mxu0 0
    %423 = vmatpush1.bf16.msra.mxu0 %v401
    %424 = vmatprep.subr.bf16.mxu0 0
    %425 = vmatpush1.bf16.msra.mxu0 %v402
    %426 = vmatprep.subr.bf16.mxu0 0
    %427 = vmatpush1.bf16.msra.mxu0 %v403
    %428 = vmatprep.subr.bf16.mxu0 0
    %429 = vmatpush1.bf16.msra.mxu0 0
    %430 = vmatprep.subr.bf16.mxu0 0
    %431 = vmatpush1.bf16.msra.mxu0 0
    %432 = vmatprep.subr.bf16.mxu0 0
    %433 = vmatpush1.bf16.msra.mxu0 0
    %434 = vmatprep.subr.bf16.mxu0 0
    %435 = vmatpush1.bf16.msra.mxu0 0
    %436 = vmatprep.subr.bf16.mxu0 0
    %437 = vmatpush1.bf16.msra.mxu0 0
    %438 = vmatprep.subr.bf16.mxu0 0
    %439 = vmatpush1.bf16.msra.mxu0 0
    %440 = vmatprep.subr.bf16.mxu0 0
    %441 = vmatpush1.bf16.msra.mxu0 0
    %442 = vmatprep.subr.bf16.mxu0 0
    %443 = vmatpush1.bf16.msra.mxu0 0
    %444 = vmatprep.mubr.bf16.mxu0 0
    %445 = vmatmul.mubr.bf16.gmra.mrb[0].mxu0 %v363
    %v446 = vpop.f32.mrb[0].mxu0
    %v447 = vadd.f32 0.0, %v446
    %v448 = vpop.f32.mrb[0].mxu0
    %v449 = vpop.f32.mrb[0].mxu0
    %v450 = vpop.f32.mrb[0].mxu0
    %451 = vdwg.mxu0
    %v452 = vlaneseq
    %v453 = vshrl.u32 %v452, 7
    %v454 = vsub.s32 0, %v453
    %v455 = vrot.slane %v447, %v454
    %v472 = vunpack.c.l.b16 %v330
    %v473 = vunpack.c.l.b16 %v331
    %v474 = vunpack.c.l.b16 %v332
    %v475 = vunpack.c.l.b16 %v333
    %v476 = vunpack.c.l.b16 %v334
    %v477 = vunpack.c.l.b16 %v335
    %v478 = vunpack.c.l.b16 %v336
    %v479 = vunpack.c.l.b16 %v337
    %v480 = vunpack.c.l.b16 %v338
    %v481 = vunpack.c.l.b16 %v339
    %v482 = vunpack.c.l.b16 %v340
    %v483 = vunpack.c.l.b16 %v341
    %v484 = vunpack.c.l.b16 %v342
    %v485 = vunpack.c.l.b16 %v343
    %v486 = vunpack.c.l.b16 %v344
    %v487 = vunpack.c.l.b16 %v345
    %v488 = vpack.c.b16 %v473, %v472
    %v489 = vpack.c.b16 %v475, %v474
    %v490 = vpack.c.b16 %v477, %v476
    %v491 = vpack.c.b16 %v479, %v478
    %v492 = vpack.c.b16 %v481, %v480
    %v493 = vpack.c.b16 %v483, %v482
    %v494 = vpack.c.b16 %v485, %v484
    %v495 = vpack.c.b16 %v487, %v486
    %504 = vmatprep.subr.bf16.mxu0 0
    %505 = vmatpush1.bf16.msra.mxu0 %v488
    %506 = vmatprep.subr.bf16.mxu0 0
    %507 = vmatpush1.bf16.msra.mxu0 %v489
    %508 = vmatprep.subr.bf16.mxu0 0
    %509 = vmatpush1.bf16.msra.mxu0 %v490
    %510 = vmatprep.subr.bf16.mxu0 0
    %511 = vmatpush1.bf16.msra.mxu0 %v491
    %512 = vmatprep.subr.bf16.mxu0 0
    %513 = vmatpush1.bf16.msra.mxu0 %v492
    %514 = vmatprep.subr.bf16.mxu0 0
    %515 = vmatpush1.bf16.msra.mxu0 %v493
    %516 = vmatprep.subr.bf16.mxu0 0
    %517 = vmatpush1.bf16.msra.mxu0 %v494
    %518 = vmatprep.subr.bf16.mxu0 0
    %519 = vmatpush1.bf16.msra.mxu0 %v495
    %520 = vmatprep.subr.bf16.mxu0 0
    %521 = vmatpush1.bf16.msra.mxu0 0
    %522 = vmatprep.subr.bf16.mxu0 0
    %523 = vmatpush1.bf16.msra.mxu0 0
    %524 = vmatprep.subr.bf16.mxu0 0
    %525 = vmatpush1.bf16.msra.mxu0 0
    %526 = vmatprep.subr.bf16.mxu0 0
    %527 = vmatpush1.bf16.msra.mxu0 0
    %528 = vmatprep.subr.bf16.mxu0 0
    %529 = vmatpush1.bf16.msra.mxu0 0
    %530 = vmatprep.subr.bf16.mxu0 0
    %531 = vmatpush1.bf16.msra.mxu0 0
    %532 = vmatprep.subr.bf16.mxu0 0
    %533 = vmatpush1.bf16.msra.mxu0 0
    %534 = vmatprep.subr.bf16.mxu0 0
    %535 = vmatpush1.bf16.msra.mxu0 0
    %536 = vmatprep.mubr.bf16.mxu0 0
    %537 = vmatmul.mubr.bf16.gmra.mrb[0].mxu0 %v346
    %v538 = vpop.f32.mrb[0].mxu0
    %v539 = vadd.f32 %v455, %v538
    %v540 = vpop.f32.mrb[0].mxu0
    %v541 = vpop.f32.mrb[0].mxu0
    %v542 = vpop.f32.mrb[0].mxu0
    %543 = vdwg.mxu0
    %v544 = vlaneseq
    %v545 = vshrl.u32 %v544, 7
    %v546 = vsub.s32 2, %v545
    %v547 = vrot.slane %v69, %v546
    %v548 = vadd.f32 %v539, %v547
    %v549 = vmax.f32 %v548, 0.0
    %v550 = vld [vmem:[#allocation3 + $0x120] sm:$0xf]
    %v551 = vld [vmem:[#allocation3 + $0x124] sm:$0xf]
    %v552 = vld [vmem:[#allocation3 + $0x128] sm:$0xf]
    %v553 = vld [vmem:[#allocation3 + $0x12c] sm:$0xf]
    %v554 = vld [vmem:[#allocation3 + $0x130] sm:$0xf]
    %v555 = vld [vmem:[#allocation3 + $0x134] sm:$0xf]
    %v556 = vld [vmem:[#allocation3 + $0x138] sm:$0xf]
    %v557 = vld [vmem:[#allocation3 + $0x13c] sm:$0xf]
    %v558 = vld [vmem:[#allocation3 + $0x140] sm:$0xf]
    %v559 = vld [vmem:[#allocation3 + $0x144] sm:$0xf]
    %v560 = vld [vmem:[#allocation3 + $0x148] sm:$0xf]
    %v561 = vld [vmem:[#allocation3 + $0x14c] sm:$0xf]
    %v562 = vld [vmem:[#allocation3 + $0x150] sm:$0xf]
    %v563 = vld [vmem:[#allocation3 + $0x154] sm:$0xf]
    %v564 = vld [vmem:[#allocation3 + $0x158] sm:$0xf]
    %v565 = vld [vmem:[#allocation3 + $0x15c] sm:$0xf]
    %v566 = vpack.c.bf16 %v549, %v549
    %v567 = vlaneseq
    %v568 = vshrl.u32 %v567, 7
    %v569 = vsub.s32 3, %v568
    %v570 = vrot.slane %v69, %v569
    %v587 = vunpack.c.l.b16 %v550
    %v588 = vunpack.c.l.b16 %v551
    %v589 = vunpack.c.l.b16 %v552
    %v590 = vunpack.c.l.b16 %v553
    %v591 = vunpack.c.l.b16 %v554
    %v592 = vunpack.c.l.b16 %v555
    %v593 = vunpack.c.l.b16 %v556
    %v594 = vunpack.c.l.b16 %v557
    %v595 = vunpack.c.l.b16 %v558
    %v596 = vunpack.c.l.b16 %v559
    %v597 = vunpack.c.l.b16 %v560
    %v598 = vunpack.c.l.b16 %v561
    %v599 = vunpack.c.l.b16 %v562
    %v600 = vunpack.c.l.b16 %v563
    %v601 = vunpack.c.l.b16 %v564
    %v602 = vunpack.c.l.b16 %v565
    %v603 = vpack.c.b16 %v588, %v587
    %v604 = vpack.c.b16 %v590, %v589
    %v605 = vpack.c.b16 %v592, %v591
    %v606 = vpack.c.b16 %v594, %v593
    %v607 = vpack.c.b16 %v596, %v595
    %v608 = vpack.c.b16 %v598, %v597
    %v609 = vpack.c.b16 %v600, %v599
    %v610 = vpack.c.b16 %v602, %v601
    %619 = vmatprep.subr.bf16.mxu0 0
    %620 = vmatpush1.bf16.msra.mxu0 %v603
    %621 = vmatprep.subr.bf16.mxu0 0
    %622 = vmatpush1.bf16.msra.mxu0 %v604
    %623 = vmatprep.subr.bf16.mxu0 0
    %624 = vmatpush1.bf16.msra.mxu0 %v605
    %625 = vmatprep.subr.bf16.mxu0 0
    %626 = vmatpush1.bf16.msra.mxu0 %v606
    %627 = vmatprep.subr.bf16.mxu0 0
    %628 = vmatpush1.bf16.msra.mxu0 %v607
    %629 = vmatprep.subr.bf16.mxu0 0
    %630 = vmatpush1.bf16.msra.mxu0 %v608
    %631 = vmatprep.subr.bf16.mxu0 0
    %632 = vmatpush1.bf16.msra.mxu0 %v609
    %633 = vmatprep.subr.bf16.mxu0 0
    %634 = vmatpush1.bf16.msra.mxu0 %v610
    %635 = vmatprep.subr.bf16.mxu0 0
    %636 = vmatpush1.bf16.msra.mxu0 0
    %637 = vmatprep.subr.bf16.mxu0 0
    %638 = vmatpush1.bf16.msra.mxu0 0
    %639 = vmatprep.subr.bf16.mxu0 0
    %640 = vmatpush1.bf16.msra.mxu0 0
    %641 = vmatprep.subr.bf16.mxu0 0
    %642 = vmatpush1.bf16.msra.mxu0 0
    %643 = vmatprep.subr.bf16.mxu0 0
    %644 = vmatpush1.bf16.msra.mxu0 0
    %645 = vmatprep.subr.bf16.mxu0 0
    %646 = vmatpush1.bf16.msra.mxu0 0
    %647 = vmatprep.subr.bf16.mxu0 0
    %648 = vmatpush1.bf16.msra.mxu0 0
    %649 = vmatprep.subr.bf16.mxu0 0
    %650 = vmatpush1.bf16.msra.mxu0 0
    %651 = vmatprep.mubr.bf16.mxu0 0
    %652 = vmatmul.mubr.bf16.gmra.mrb[0].mxu0 %v566
    %v653 = vpop.f32.mrb[0].mxu0
    %v654 = vadd.f32 %v570, %v653
    %v655 = vpop.f32.mrb[0].mxu0
    %v656 = vpop.f32.mrb[0].mxu0
    %v657 = vpop.f32.mrb[0].mxu0
    %658 = vdwg.mxu0
    %v659 = vmax.f32 %v654, 0.0
    %v660 = vld [vmem:[#allocation3 + $0x160] sm:$0xf]
    %v661 = vld [vmem:[#allocation3 + $0x164] sm:$0xf]
    %v662 = vld [vmem:[#allocation3 + $0x168] sm:$0xf]
    %v663 = vld [vmem:[#allocation3 + $0x16c] sm:$0xf]
    %v664 = vld [vmem:[#allocation3 + $0x170] sm:$0xf]
    %v665 = vld [vmem:[#allocation3 + $0x174] sm:$0xf]
    %v666 = vld [vmem:[#allocation3 + $0x178] sm:$0xf]
    %v667 = vld [vmem:[#allocation3 + $0x17c] sm:$0xf]
    %v668 = vld [vmem:[#allocation3 + $0x180] sm:$0xf]
    %v669 = vld [vmem:[#allocation3 + $0x184] sm:$0xf]
    %v670 = vld [vmem:[#allocation3 + $0x188] sm:$0xf]
    %v671 = vld [vmem:[#allocation3 + $0x18c] sm:$0xf]
    %v672 = vld [vmem:[#allocation3 + $0x190] sm:$0xf]
    %v673 = vld [vmem:[#allocation3 + $0x194] sm:$0xf]
    %v674 = vld [vmem:[#allocation3 + $0x198] sm:$0xf]
    %v675 = vld [vmem:[#allocation3 + $0x19c] sm:$0xf]
    %v676 = vpack.c.bf16 %v659, %v659
    %v677 = vlaneseq
    %v678 = vshrl.u32 %v677, 7
    %v679 = vsub.s32 4, %v678
    %v680 = vrot.slane %v69, %v679
    %v697 = vunpack.c.l.b16 %v660
    %v698 = vunpack.c.l.b16 %v661
    %v699 = vunpack.c.l.b16 %v662
    %v700 = vunpack.c.l.b16 %v663
    %v701 = vunpack.c.l.b16 %v664
    %v702 = vunpack.c.l.b16 %v665
    %v703 = vunpack.c.l.b16 %v666
    %v704 = vunpack.c.l.b16 %v667
    %v705 = vunpack.c.l.b16 %v668
    %v706 = vunpack.c.l.b16 %v669
    %v707 = vunpack.c.l.b16 %v670
    %v708 = vunpack.c.l.b16 %v671
    %v709 = vunpack.c.l.b16 %v672
    %v710 = vunpack.c.l.b16 %v673
    %v711 = vunpack.c.l.b16 %v674
    %v712 = vunpack.c.l.b16 %v675
    %v713 = vpack.c.b16 %v698, %v697
    %v714 = vpack.c.b16 %v700, %v699
    %v715 = vpack.c.b16 %v702, %v701
    %v716 = vpack.c.b16 %v704, %v703
    %v717 = vpack.c.b16 %v706, %v705
    %v718 = vpack.c.b16 %v708, %v707
    %v719 = vpack.c.b16 %v710, %v709
    %v720 = vpack.c.b16 %v712, %v711
    %729 = vmatprep.subr.bf16.mxu0 0
    %730 = vmatpush1.bf16.msra.mxu0 %v713
    %731 = vmatprep.subr.bf16.mxu0 0
    %732 = vmatpush1.bf16.msra.mxu0 %v714
    %733 = vmatprep.subr.bf16.mxu0 0
    %734 = vmatpush1.bf16.msra.mxu0 %v715
    %735 = vmatprep.subr.bf16.mxu0 0
    %736 = vmatpush1.bf16.msra.mxu0 %v716
    %737 = vmatprep.subr.bf16.mxu0 0
    %738 = vmatpush1.bf16.msra.mxu0 %v717
    %739 = vmatprep.subr.bf16.mxu0 0
    %740 = vmatpush1.bf16.msra.mxu0 %v718
    %741 = vmatprep.subr.bf16.mxu0 0
    %742 = vmatpush1.bf16.msra.mxu0 %v719
    %743 = vmatprep.subr.bf16.mxu0 0
    %744 = vmatpush1.bf16.msra.mxu0 %v720
    %745 = vmatprep.subr.bf16.mxu0 0
    %746 = vmatpush1.bf16.msra.mxu0 0
    %747 = vmatprep.subr.bf16.mxu0 0
    %748 = vmatpush1.bf16.msra.mxu0 0
    %749 = vmatprep.subr.bf16.mxu0 0
    %750 = vmatpush1.bf16.msra.mxu0 0
    %751 = vmatprep.subr.bf16.mxu0 0
    %752 = vmatpush1.bf16.msra.mxu0 0
    %753 = vmatprep.subr.bf16.mxu0 0
    %754 = vmatpush1.bf16.msra.mxu0 0
    %755 = vmatprep.subr.bf16.mxu0 0
    %756 = vmatpush1.bf16.msra.mxu0 0
    %757 = vmatprep.subr.bf16.mxu0 0
    %758 = vmatpush1.bf16.msra.mxu0 0
    %759 = vmatprep.subr.bf16.mxu0 0
    %760 = vmatpush1.bf16.msra.mxu0 0
    %761 = vmatprep.mubr.bf16.mxu0 0
    %762 = vmatmul.mubr.bf16.gmra.mrb[0].mxu0 %v676
    %v763 = vpop.f32.mrb[0].mxu0
    %v764 = vadd.f32 %v680, %v763
    %v765 = vpop.f32.mrb[0].mxu0
    %v766 = vpop.f32.mrb[0].mxu0
    %v767 = vpop.f32.mrb[0].mxu0
    %768 = vdwg.mxu0
    %v769 = vmax.f32 %v764, 0.0
    %v770 = vld [vmem:[#allocation8] sm:$0xff]
    %v771 = vld [vmem:[#allocation8 + $0x8] sm:$0xff]
    %v772 = vld [vmem:[#allocation8 + $0x10] sm:$0xff]
    %v773 = vld [vmem:[#allocation8 + $0x18] sm:$0xff]
    %v774 = vld [vmem:[#allocation8 + $0x20] sm:$0xff]
    %v775 = vld [vmem:[#allocation8 + $0x28] sm:$0xff]
    %v776 = vld [vmem:[#allocation8 + $0x30] sm:$0xff]
    %v777 = vld [vmem:[#allocation8 + $0x38] sm:$0xff]
    %v778 = vld [vmem:[#allocation8 + $0x40] sm:$0xff]
    %v779 = vld [vmem:[#allocation8 + $0x48] sm:$0xff]
    %v780 = vld [vmem:[#allocation8 + $0x50] sm:$0xff]
    %v781 = vld [vmem:[#allocation8 + $0x58] sm:$0xff]
    %v782 = vld [vmem:[#allocation8 + $0x60] sm:$0xff]
    %v783 = vld [vmem:[#allocation8 + $0x68] sm:$0xff]
    %v784 = vld [vmem:[#allocation8 + $0x70] sm:$0xff]
    %v785 = vld [vmem:[#allocation8 + $0x78] sm:$0xff]
    %v786 = vld [vmem:[#allocation8 + $0x80] sm:$0xff]
    %v787 = vld [vmem:[#allocation8 + $0x88] sm:$0xff]
    %v788 = vld [vmem:[#allocation8 + $0x90] sm:$0xff]
    %v789 = vld [vmem:[#allocation8 + $0x98] sm:$0xff]
    %v790 = vld [vmem:[#allocation8 + $0xa0] sm:$0xff]
    %v791 = vld [vmem:[#allocation8 + $0xa8] sm:$0xff]
    %v792 = vld [vmem:[#allocation8 + $0xb0] sm:$0xff]
    %v793 = vld [vmem:[#allocation8 + $0xb8] sm:$0xff]
    %v794 = vld [vmem:[#allocation8 + $0xc0] sm:$0xff]
    %v795 = vld [vmem:[#allocation8 + $0xc8] sm:$0xff]
    %v796 = vld [vmem:[#allocation8 + $0xd0] sm:$0xff]
    %v797 = vld [vmem:[#allocation8 + $0xd8] sm:$0xff]
    %v798 = vld [vmem:[#allocation8 + $0xe0] sm:$0xff]
    %v799 = vld [vmem:[#allocation8 + $0xe8] sm:$0xff]
    %v800 = vld [vmem:[#allocation8 + $0xf0] sm:$0xff]
    %v801 = vld [vmem:[#allocation8 + $0xf8] sm:$0xff]
    %802 = vmatprep.subr.mxu0 0.0
    %803 = vmatpush1.msra.mxu0 %v770
    %804 = vmatprep.subr.mxu0 0.0
    %805 = vmatpush1.msra.mxu0 %v771
    %806 = vmatprep.subr.mxu0 0.0
    %807 = vmatpush1.msra.mxu0 %v772
    %808 = vmatprep.subr.mxu0 0.0
    %809 = vmatpush1.msra.mxu0 %v773
    %810 = vmatprep.subr.mxu0 0.0
    %811 = vmatpush1.msra.mxu0 %v774
    %812 = vmatprep.subr.mxu0 0.0
    %813 = vmatpush1.msra.mxu0 %v775
    %814 = vmatprep.subr.mxu0 0.0
    %815 = vmatpush1.msra.mxu0 %v776
    %816 = vmatprep.subr.mxu0 0.0
    %817 = vmatpush1.msra.mxu0 %v777
    %818 = vmatprep.subr.mxu0 0.0
    %819 = vmatpush1.msra.mxu0 %v778
    %820 = vmatprep.subr.mxu0 0.0
    %821 = vmatpush1.msra.mxu0 %v779
    %822 = vmatprep.subr.mxu0 0.0
    %823 = vmatpush1.msra.mxu0 %v780
    %824 = vmatprep.subr.mxu0 0.0
    %825 = vmatpush1.msra.mxu0 %v781
    %826 = vmatprep.subr.mxu0 0.0
    %827 = vmatpush1.msra.mxu0 %v782
    %828 = vmatprep.subr.mxu0 0.0
    %829 = vmatpush1.msra.mxu0 %v783
    %830 = vmatprep.subr.mxu0 0.0
    %831 = vmatpush1.msra.mxu0 %v784
    %832 = vmatprep.subr.mxu0 0.0
    %833 = vmatpush1.msra.mxu0 %v785
    %834 = vmatprep.subr.mxu0 0.0
    %835 = vmatpush1.msra.mxu0 0.0
    %836 = vmatprep.subr.mxu0 0.0
    %837 = vmatpush1.msra.mxu0 0.0
    %838 = vmatprep.subr.mxu0 0.0
    %839 = vmatpush1.msra.mxu0 0.0
    %840 = vmatprep.subr.mxu0 0.0
    %841 = vmatpush1.msra.mxu0 0.0
    %842 = vmatprep.subr.mxu0 0.0
    %843 = vmatpush1.msra.mxu0 0.0
    %844 = vmatprep.subr.mxu0 0.0
    %845 = vmatpush1.msra.mxu0 0.0
    %846 = vmatprep.subr.mxu0 0.0
    %847 = vmatpush1.msra.mxu0 0.0
    %848 = vmatprep.subr.mxu0 0.0
    %849 = vmatpush1.msra.mxu0 0.0
    %850 = vmatprep.subr.mxu0 0.0
    %851 = vmatpush1.msra.mxu0 0.0
    %852 = vmatprep.subr.mxu0 0.0
    %853 = vmatpush1.msra.mxu0 0.0
    %854 = vmatprep.subr.mxu0 0.0
    %855 = vmatpush1.msra.mxu0 0.0
    %856 = vmatprep.subr.mxu0 0.0
    %857 = vmatpush1.msra.mxu0 0.0
    %858 = vmatprep.subr.mxu0 0.0
    %859 = vmatpush1.msra.mxu0 0.0
    %860 = vmatprep.subr.mxu0 0.0
    %861 = vmatpush1.msra.mxu0 0.0
    %862 = vmatprep.subr.mxu0 0.0
    %863 = vmatpush1.msra.mxu0 0.0
    %864 = vmatprep.subr.mxu0 0.0
    %865 = vmatpush1.msra.mxu0 0.0
    %866 = vmatprep.mubr.f32.mxu0 0.0
    %867 = vmatmul.mubr.f32.gmra.mrb[0].mxu0 %v769
    %v868 = vpop.f32.mrb[0].mxu0
    %v869 = vadd.f32 0.0, %v868
    %v870 = vpop.f32.mrb[0].mxu0
    %871 = vdwg.mxu0
    %v872 = vmul.f32 %v769, %v769
    %vm873 = vcmask 1044480
    %v874 = vsel %vm873, %v872, 0.0
    %875 = vadd.xlane.f32.xlu0 %v874
    %v876 = vpop.xlane.xlu0 %875
    %v877 = vmul.f32 %v869, 2.0
    %v878 = vsub.f32 %v876, %v877
    %v879 = vlaneseq
    %v880 = vshrl.u32 %v879, 7
    %v881 = vsub.s32 5, %v880
    %v882 = vrot.slane %v69, %v881
    %v883 = vadd.f32 %v878, %v882
    %v884 = vlaneseq
    %v885 = vand.u32 %v884, 127
    %vm886 = vcmp.lt.s32.totalorder %v885, 6
    %v887 = vsel %vm886, %v883, inf
    %v888 = vsel %vm873, %v887, inf
    %889 = vmin.xlane.f32.xlu0 %v888
    %v890 = vpop.xlane.xlu0 %889
    %vm891 = vcmp.le.f32.partialorder %v887, %v890
    %v892 = vsel %vm891, %v885, 128
    %v893 = vsel %vm873, %v892, 2147483647
    %v894 = vand.u32 %v893, 65535
    %v895 = vshra.s32 %v893, 16
    %v896 = vcvt.s32.f32 %v894
    %v897 = vcvt.s32.f32 %v895
    %898 = vmin.xlane.f32.xlu0 %v897
    %v899 = vpop.xlane.xlu0 %898
    %vm900 = vcmp.eq.f32.partialorder %v897, %v899
    %v901 = vsel %vm900, %v896, inf
    %902 = vmin.xlane.f32.xlu0 %v901
    %v903 = vpop.xlane.xlu0 %902
    %v904 = vcvt.f32.s32 %v903
    %v905 = vcvt.f32.s32 %v899
    %v906 = vshll.u32 %v905, 16
    %v907 = vadd.s32 %v906, %v904
    %vm908 = vcmp.eq.s32.totalorder %v885, %v907
    %v909 = vsel %vm908, 1, 0
    %v910 = vcvt.s32.f32 %v909
    %911 = vmatprep.subr.mxu0 0.0
    %912 = vmatpush1.msra.mxu0 %v786
    %913 = vmatprep.subr.mxu0 0.0
    %914 = vmatpush1.msra.mxu0 %v787
    %915 = vmatprep.subr.mxu0 0.0
    %916 = vmatpush1.msra.mxu0 %v788
    %917 = vmatprep.subr.mxu0 0.0
    %918 = vmatpush1.msra.mxu0 %v789
    %919 = vmatprep.subr.mxu0 0.0
    %920 = vmatpush1.msra.mxu0 %v790
    %921 = vmatprep.subr.mxu0 0.0
    %922 = vmatpush1.msra.mxu0 %v791
    %923 = vmatprep.subr.mxu0 0.0
    %924 = vmatpush1.msra.mxu0 %v792
    %925 = vmatprep.subr.mxu0 0.0
    %926 = vmatpush1.msra.mxu0 %v793
    %927 = vmatprep.subr.mxu0 0.0
    %928 = vmatpush1.msra.mxu0 %v794
    %929 = vmatprep.subr.mxu0 0.0
    %930 = vmatpush1.msra.mxu0 %v795
    %931 = vmatprep.subr.mxu0 0.0
    %932 = vmatpush1.msra.mxu0 %v796
    %933 = vmatprep.subr.mxu0 0.0
    %934 = vmatpush1.msra.mxu0 %v797
    %935 = vmatprep.subr.mxu0 0.0
    %936 = vmatpush1.msra.mxu0 %v798
    %937 = vmatprep.subr.mxu0 0.0
    %938 = vmatpush1.msra.mxu0 %v799
    %939 = vmatprep.subr.mxu0 0.0
    %940 = vmatpush1.msra.mxu0 %v800
    %941 = vmatprep.subr.mxu0 0.0
    %942 = vmatpush1.msra.mxu0 %v801
    %943 = vmatprep.subr.mxu0 0.0
    %944 = vmatpush1.msra.mxu0 0.0
    %945 = vmatprep.subr.mxu0 0.0
    %946 = vmatpush1.msra.mxu0 0.0
    %947 = vmatprep.subr.mxu0 0.0
    %948 = vmatpush1.msra.mxu0 0.0
    %949 = vmatprep.subr.mxu0 0.0
    %950 = vmatpush1.msra.mxu0 0.0
    %951 = vmatprep.subr.mxu0 0.0
    %952 = vmatpush1.msra.mxu0 0.0
    %953 = vmatprep.subr.mxu0 0.0
    %954 = vmatpush1.msra.mxu0 0.0
    %955 = vmatprep.subr.mxu0 0.0
    %956 = vmatpush1.msra.mxu0 0.0
    %957 = vmatprep.subr.mxu0 0.0
    %958 = vmatpush1.msra.mxu0 0.0
    %959 = vmatprep.subr.mxu0 0.0
    %960 = vmatpush1.msra.mxu0 0.0
    %961 = vmatprep.subr.mxu0 0.0
    %962 = vmatpush1.msra.mxu0 0.0
    %963 = vmatprep.subr.mxu0 0.0
    %964 = vmatpush1.msra.mxu0 0.0
    %965 = vmatprep.subr.mxu0 0.0
    %966 = vmatpush1.msra.mxu0 0.0
    %967 = vmatprep.subr.mxu0 0.0
    %968 = vmatpush1.msra.mxu0 0.0
    %969 = vmatprep.subr.mxu0 0.0
    %970 = vmatpush1.msra.mxu0 0.0
    %971 = vmatprep.subr.mxu0 0.0
    %972 = vmatpush1.msra.mxu0 0.0
    %973 = vmatprep.subr.mxu0 0.0
    %974 = vmatpush1.msra.mxu0 0.0
    %975 = vmatprep.mubr.f32.mxu0 0.0
    %976 = vmatmul.mubr.f32.gmra.mrb[0].mxu0 %v910
    %v977 = vpop.f32.mrb[0].mxu0
    %v978 = vadd.f32 0.0, %v977
    %v979 = vpop.f32.mrb[0].mxu0
    %980 = vdwg.mxu0
    %v981 = vsub.f32 %v978, %v769
    %v982 = vmul.f32 %v981, %v981
    %v983 = vsel %vm873, %v982, 0.0
    %984 = vadd.xlane.f32.xlu0 %v983
    %v985 = vpop.xlane.xlu0 %984
    %v986 = vsel %vm873, %v985, 0.0
    %v987 = vrot.slane %v986, 4
    %v988 = vadd.f32 %v986, %v987
    %v989 = vrot.slane %v988, 2
    %v990 = vadd.f32 %v988, %v989
    %v991 = vrot.slane %v990, 1
    %v992 = vadd.f32 %v990, %v991
    %v993 = vmul.f32 %v992, 0.00625
    %vm994 = vcmask 0
    %995 = vst.msk [vmem:[#allocation10] sm:$0x1] %vm994, %v993
    %v996 = vld [vmem:[%s2] sm:$0x1f]
    %vm997 = vcmp.gt.f32.partialorder %v996, 0.0
    %v998 = vld [vmem:[#allocation6] sm:$0xff]
    %v999 = vld [vmem:[#allocation6 + $0x8] sm:$0xf]
    %v1000 = vld [vmem:[#allocation6 + $0xc] sm:$0xff]
    %v1001 = vld [vmem:[#allocation6 + $0x14] sm:$0xf]
    %v1002 = vld [vmem:[#allocation6 + $0x18] sm:$0xff]
    %v1003 = vld [vmem:[#allocation6 + $0x20] sm:$0xf]
    %v1004 = vld [vmem:[#allocation6 + $0x24] sm:$0xff]
    %v1005 = vld [vmem:[#allocation6 + $0x2c] sm:$0xf]
    %v1006 = vld [vmem:[#allocation6 + $0x30] sm:$0xff]
    %v1007 = vld [vmem:[#allocation6 + $0x38] sm:$0xf]
    %v1008 = vld [vmem:[#allocation6 + $0x3c] sm:$0xff]
    %v1009 = vld [vmem:[#allocation6 + $0x44] sm:$0xf]
    %v1010 = vld [vmem:[#allocation6 + $0x48] sm:$0xff]
    %v1011 = vld [vmem:[#allocation6 + $0x50] sm:$0xf]
    %v1012 = vld [vmem:[#allocation6 + $0x54] sm:$0xff]
    %v1013 = vld [vmem:[#allocation6 + $0x5c] sm:$0xf]
    %v1014 = vld [vmem:[#allocation6 + $0x60] sm:$0xff]
    %v1015 = vld [vmem:[#allocation6 + $0x68] sm:$0xf]
    %v1016 = vld [vmem:[#allocation6 + $0x6c] sm:$0xff]
    %v1017 = vld [vmem:[#allocation6 + $0x74] sm:$0xf]
    %v1018 = vld [vmem:[#allocation6 + $0x78] sm:$0xff]
    %v1019 = vld [vmem:[#allocation6 + $0x80] sm:$0xf]
    %v1020 = vld [vmem:[#allocation6 + $0x84] sm:$0xff]
    %v1021 = vld [vmem:[#allocation6 + $0x8c] sm:$0xf]
    %v1022 = vld [vmem:[#allocation6 + $0x90] sm:$0xff]
    %v1023 = vld [vmem:[#allocation6 + $0x98] sm:$0xf]
    %v1024 = vld [vmem:[#allocation6 + $0x9c] sm:$0xff]
    %v1025 = vld [vmem:[#allocation6 + $0xa4] sm:$0xf]
    %v1026 = vld [vmem:[#allocation6 + $0xa8] sm:$0xff]
    %v1027 = vld [vmem:[#allocation6 + $0xb0] sm:$0xf]
    %v1028 = vld [vmem:[#allocation6 + $0xb4] sm:$0xff]
    %v1029 = vld [vmem:[#allocation6 + $0xbc] sm:$0xf]
    %v1030 = vpack.c.bf16 %v978, %v978
    %v1063 = vunpack.c.l.b16 %v998
    %v1064 = vunpack.c.h.b16 %v998
    %v1065 = vunpack.c.l.b16 %v999
    %v1066 = vunpack.c.l.b16 %v1000
    %v1067 = vunpack.c.h.b16 %v1000
    %v1068 = vunpack.c.l.b16 %v1001
    %v1069 = vunpack.c.l.b16 %v1002
    %v1070 = vunpack.c.h.b16 %v1002
    %v1071 = vunpack.c.l.b16 %v1003
    %v1072 = vunpack.c.l.b16 %v1004
    %v1073 = vunpack.c.h.b16 %v1004
    %v1074 = vunpack.c.l.b16 %v1005
    %v1075 = vunpack.c.l.b16 %v1006
    %v1076 = vunpack.c.h.b16 %v1006
    %v1077 = vunpack.c.l.b16 %v1007
    %v1078 = vunpack.c.l.b16 %v1008
    %v1079 = vunpack.c.h.b16 %v1008
    %v1080 = vunpack.c.l.b16 %v1009
    %v1081 = vunpack.c.l.b16 %v1010
    %v1082 = vunpack.c.h.b16 %v1010
    %v1083 = vunpack.c.l.b16 %v1011
    %v1084 = vunpack.c.l.b16 %v1012
    %v1085 = vunpack.c.h.b16 %v1012
    %v1086 = vunpack.c.l.b16 %v1013
    %v1087 = vunpack.c.l.b16 %v1014
    %v1088 = vunpack.c.h.b16 %v1014
    %v1089 = vunpack.c.l.b16 %v1015
    %v1090 = vunpack.c.l.b16 %v1016
    %v1091 = vunpack.c.h.b16 %v1016
    %v1092 = vunpack.c.l.b16 %v1017
    %v1093 = vunpack.c.l.b16 %v1018
    %v1094 = vunpack.c.h.b16 %v1018
    %v1095 = vunpack.c.l.b16 %v1019
    %v1096 = vunpack.c.l.b16 %v1020
    %v1097 = vunpack.c.h.b16 %v1020
    %v1098 = vunpack.c.l.b16 %v1021
    %v1099 = vunpack.c.l.b16 %v1022
    %v1100 = vunpack.c.h.b16 %v1022
    %v1101 = vunpack.c.l.b16 %v1023
    %v1102 = vunpack.c.l.b16 %v1024
    %v1103 = vunpack.c.h.b16 %v1024
    %v1104 = vunpack.c.l.b16 %v1025
    %v1105 = vunpack.c.l.b16 %v1026
    %v1106 = vunpack.c.h.b16 %v1026
    %v1107 = vunpack.c.l.b16 %v1027
    %v1108 = vunpack.c.l.b16 %v1028
    %v1109 = vunpack.c.h.b16 %v1028
    %v1110 = vunpack.c.l.b16 %v1029
    %v1111 = vpack.c.b16 %v1066, %v1063
    %v1112 = vpack.c.b16 %v1067, %v1064
    %v1113 = vpack.c.b16 %v1068, %v1065
    %v1114 = vpack.c.b16 %v1072, %v1069
    %v1115 = vpack.c.b16 %v1073, %v1070
    %v1116 = vpack.c.b16 %v1074, %v1071
    %v1117 = vpack.c.b16 %v1078, %v1075
    %v1118 = vpack.c.b16 %v1079, %v1076
    %v1119 = vpack.c.b16 %v1080, %v1077
    %v1120 = vpack.c.b16 %v1084, %v1081
    %v1121 = vpack.c.b16 %v1085, %v1082
    %v1122 = vpack.c.b16 %v1086, %v1083
    %v1123 = vpack.c.b16 %v1090, %v1087
    %v1124 = vpack.c.b16 %v1091, %v1088
    %v1125 = vpack.c.b16 %v1092, %v1089
    %v1126 = vpack.c.b16 %v1096, %v1093
    %v1127 = vpack.c.b16 %v1097, %v1094
    %v1128 = vpack.c.b16 %v1098, %v1095
    %v1129 = vpack.c.b16 %v1102, %v1099
    %v1130 = vpack.c.b16 %v1103, %v1100
    %v1131 = vpack.c.b16 %v1104, %v1101
    %v1132 = vpack.c.b16 %v1108, %v1105
    %v1133 = vpack.c.b16 %v1109, %v1106
    %v1134 = vpack.c.b16 %v1110, %v1107
    %1159 = vmatprep.subr.bf16.mxu0 %v1112
    %1160 = vmatpush1.bf16.msra.mxu0 %v1111
    %1161 = vmatprep.subr.bf16.mxu0 %v1115
    %1162 = vmatpush1.bf16.msra.mxu0 %v1114
    %1163 = vmatprep.subr.bf16.mxu0 %v1118
    %1164 = vmatpush1.bf16.msra.mxu0 %v1117
    %1165 = vmatprep.subr.bf16.mxu0 %v1121
    %1166 = vmatpush1.bf16.msra.mxu0 %v1120
    %1167 = vmatprep.subr.bf16.mxu0 %v1124
    %1168 = vmatpush1.bf16.msra.mxu0 %v1123
    %1169 = vmatprep.subr.bf16.mxu0 %v1127
    %1170 = vmatpush1.bf16.msra.mxu0 %v1126
    %1171 = vmatprep.subr.bf16.mxu0 %v1130
    %1172 = vmatpush1.bf16.msra.mxu0 %v1129
    %1173 = vmatprep.subr.bf16.mxu0 %v1133
    %1174 = vmatpush1.bf16.msra.mxu0 %v1132
    %1175 = vmatprep.subr.bf16.mxu0 0
    %1176 = vmatpush1.bf16.msra.mxu0 0
    %1177 = vmatprep.subr.bf16.mxu0 0
    %1178 = vmatpush1.bf16.msra.mxu0 0
    %1179 = vmatprep.subr.bf16.mxu0 0
    %1180 = vmatpush1.bf16.msra.mxu0 0
    %1181 = vmatprep.subr.bf16.mxu0 0
    %1182 = vmatpush1.bf16.msra.mxu0 0
    %1183 = vmatprep.subr.bf16.mxu0 0
    %1184 = vmatpush1.bf16.msra.mxu0 0
    %1185 = vmatprep.subr.bf16.mxu0 0
    %1186 = vmatpush1.bf16.msra.mxu0 0
    %1187 = vmatprep.subr.bf16.mxu0 0
    %1188 = vmatpush1.bf16.msra.mxu0 0
    %1189 = vmatprep.subr.bf16.mxu0 0
    %1190 = vmatpush1.bf16.msra.mxu0 0
    %1191 = vmatprep.mubr.bf16.mxu0 0
    %1192 = vmatmul.mubr.bf16.gmra.mrb[0].mxu0 %v1030
    %v1193 = vpop.f32.mrb[0].mxu0
    %v1194 = vadd.f32 0.0, %v1193
    %v1195 = vpop.f32.mrb[0].mxu0
    %v1196 = vadd.f32 0.0, %v1195
    %v1197 = vpop.f32.mrb[0].mxu0
    %v1198 = vpop.f32.mrb[0].mxu0
    %1199 = vdwg.mxu0
    %1200 = vmatprep.subr.bf16.mxu0 0
    %1201 = vmatpush1.bf16.msra.mxu0 %v1113
    %1202 = vmatprep.subr.bf16.mxu0 0
    %1203 = vmatpush1.bf16.msra.mxu0 %v1116
    %1204 = vmatprep.subr.bf16.mxu0 0
    %1205 = vmatpush1.bf16.msra.mxu0 %v1119
    %1206 = vmatprep.subr.bf16.mxu0 0
    %1207 = vmatpush1.bf16.msra.mxu0 %v1122
    %1208 = vmatprep.subr.bf16.mxu0 0
    %1209 = vmatpush1.bf16.msra.mxu0 %v1125
    %1210 = vmatprep.subr.bf16.mxu0 0
    %1211 = vmatpush1.bf16.msra.mxu0 %v1128
    %1212 = vmatprep.subr.bf16.mxu0 0
    %1213 = vmatpush1.bf16.msra.mxu0 %v1131
    %1214 = vmatprep.subr.bf16.mxu0 0
    %1215 = vmatpush1.bf16.msra.mxu0 %v1134
    %1216 = vmatprep.subr.bf16.mxu0 0
    %1217 = vmatpush1.bf16.msra.mxu0 0
    %1218 = vmatprep.subr.bf16.mxu0 0
    %1219 = vmatpush1.bf16.msra.mxu0 0
    %1220 = vmatprep.subr.bf16.mxu0 0
    %1221 = vmatpush1.bf16.msra.mxu0 0
    %1222 = vmatprep.subr.bf16.mxu0 0
    %1223 = vmatpush1.bf16.msra.mxu0 0
    %1224 = vmatprep.subr.bf16.mxu0 0
    %1225 = vmatpush1.bf16.msra.mxu0 0
    %1226 = vmatprep.subr.bf16.mxu0 0
    %1227 = vmatpush1.bf16.msra.mxu0 0
    %1228 = vmatprep.subr.bf16.mxu0 0
    %1229 = vmatpush1.bf16.msra.mxu0 0
    %1230 = vmatprep.subr.bf16.mxu0 0
    %1231 = vmatpush1.bf16.msra.mxu0 0
    %1232 = vmatprep.mubr.bf16.mxu0 0
    %1233 = vmatmul.mubr.bf16.gmra.mrb[0].mxu0 %v1030
    %v1234 = vpop.f32.mrb[0].mxu0
    %v1235 = vadd.f32 0.0, %v1234
    %v1236 = vpop.f32.mrb[0].mxu0
    %v1237 = vpop.f32.mrb[0].mxu0
    %v1238 = vpop.f32.mrb[0].mxu0
    %1239 = vdwg.mxu0
    %v1240 = vpack.c.bf16 %v1194, %v1194
    %v1241 = vpack.c.bf16 %v1196, %v1196
    %v1242 = vpack.c.bf16 %v1235, %v1235
    %v1243 = vld [vmem:[#allocation6 + $0x300] sm:$0xf]
    %v1244 = vld [vmem:[#allocation6 + $0x30c] sm:$0xf]
    %v1245 = vld [vmem:[#allocation6 + $0x318] sm:$0xf]
    %v1246 = vld [vmem:[#allocation6 + $0x324] sm:$0xf]
    %v1247 = vld [vmem:[#allocation6 + $0x330] sm:$0xf]
    %v1248 = vld [vmem:[#allocation6 + $0x33c] sm:$0xf]
    %v1249 = vld [vmem:[#allocation6 + $0x348] sm:$0xf]
    %v1250 = vld [vmem:[#allocation6 + $0x354] sm:$0xf]
    %v1251 = vld [vmem:[#allocation6 + $0x360] sm:$0xf]
    %v1252 = vld [vmem:[#allocation6 + $0x36c] sm:$0xf]
    %v1253 = vld [vmem:[#allocation6 + $0x378] sm:$0xf]
    %v1254 = vld [vmem:[#allocation6 + $0x384] sm:$0xf]
    %v1255 = vld [vmem:[#allocation6 + $0x390] sm:$0xf]
    %v1256 = vld [vmem:[#allocation6 + $0x39c] sm:$0xf]
    %v1257 = vld [vmem:[#allocation6 + $0x3a8] sm:$0xf]
    %v1258 = vld [vmem:[#allocation6 + $0x3b4] sm:$0xf]
    %v1259 = vld [vmem:[#allocation6 + $0x3c0] sm:$0xf]
    %v1260 = vld [vmem:[#allocation6 + $0x3cc] sm:$0xf]
    %v1261 = vld [vmem:[#allocation6 + $0x3d8] sm:$0xf]
    %v1262 = vld [vmem:[#allocation6 + $0x3e4] sm:$0xf]
    %v1263 = vld [vmem:[#allocation6 + $0x3f0] sm:$0xf]
    %v1264 = vld [vmem:[#allocation6 + $0x3fc] sm:$0xf]
    %v1265 = vld [vmem:[#allocation6 + $0x408] sm:$0xf]
    %v1266 = vld [vmem:[#allocation6 + $0x414] sm:$0xf]
    %v1267 = vld [vmem:[#allocation6 + $0x420] sm:$0xf]
    %v1268 = vld [vmem:[#allocation6 + $0x42c] sm:$0xf]
    %v1269 = vld [vmem:[#allocation6 + $0x438] sm:$0xf]
    %v1270 = vld [vmem:[#allocation6 + $0x444] sm:$0xf]
    %v1271 = vld [vmem:[#allocation6 + $0x450] sm:$0xf]
    %v1272 = vld [vmem:[#allocation6 + $0x45c] sm:$0xf]
    %v1273 = vld [vmem:[#allocation6 + $0x468] sm:$0xf]
    %v1274 = vld [vmem:[#allocation6 + $0x474] sm:$0xf]
    %v1275 = vld [vmem:[#allocation6 + $0x480] sm:$0xf]
    %v1276 = vld [vmem:[#allocation6 + $0x48c] sm:$0xf]
    %v1277 = vld [vmem:[#allocation6 + $0x498] sm:$0xf]
    %v1278 = vld [vmem:[#allocation6 + $0x4a4] sm:$0xf]
    %v1279 = vld [vmem:[#allocation6 + $0x4b0] sm:$0xf]
    %v1280 = vld [vmem:[#allocation6 + $0x4bc] sm:$0xf]
    %v1281 = vld [vmem:[#allocation6 + $0x4c8] sm:$0xf]
    %v1282 = vld [vmem:[#allocation6 + $0x4d4] sm:$0xf]
    %v1283 = vld [vmem:[#allocation6 + $0x4e0] sm:$0xf]
    %v1284 = vld [vmem:[#allocation6 + $0x4ec] sm:$0xf]
    %v1285 = vld [vmem:[#allocation6 + $0x4f8] sm:$0xf]
    %v1286 = vld [vmem:[#allocation6 + $0x504] sm:$0xf]
    %v1287 = vld [vmem:[#allocation6 + $0x510] sm:$0xf]
    %v1288 = vld [vmem:[#allocation6 + $0x51c] sm:$0xf]
    %v1289 = vld [vmem:[#allocation6 + $0x528] sm:$0xf]
    %v1290 = vld [vmem:[#allocation6 + $0x534] sm:$0xf]
    %v1339 = vunpack.c.l.b16 %v1243
    %v1340 = vunpack.c.l.b16 %v1244
    %v1341 = vunpack.c.l.b16 %v1245
    %v1342 = vunpack.c.l.b16 %v1246
    %v1343 = vunpack.c.l.b16 %v1247
    %v1344 = vunpack.c.l.b16 %v1248
    %v1345 = vunpack.c.l.b16 %v1249
    %v1346 = vunpack.c.l.b16 %v1250
    %v1347 = vunpack.c.l.b16 %v1251
    %v1348 = vunpack.c.l.b16 %v1252
    %v1349 = vunpack.c.l.b16 %v1253
    %v1350 = vunpack.c.l.b16 %v1254
    %v1351 = vunpack.c.l.b16 %v1255
    %v1352 = vunpack.c.l.b16 %v1256
    %v1353 = vunpack.c.l.b16 %v1257
    %v1354 = vunpack.c.l.b16 %v1258
    %v1355 = vunpack.c.l.b16 %v1259
    %v1356 = vunpack.c.l.b16 %v1260
    %v1357 = vunpack.c.l.b16 %v1261
    %v1358 = vunpack.c.l.b16 %v1262
    %v1359 = vunpack.c.l.b16 %v1263
    %v1360 = vunpack.c.l.b16 %v1264
    %v1361 = vunpack.c.l.b16 %v1265
    %v1362 = vunpack.c.l.b16 %v1266
    %v1363 = vunpack.c.l.b16 %v1267
    %v1364 = vunpack.c.l.b16 %v1268
    %v1365 = vunpack.c.l.b16 %v1269
    %v1366 = vunpack.c.l.b16 %v1270
    %v1367 = vunpack.c.l.b16 %v1271
    %v1368 = vunpack.c.l.b16 %v1272
    %v1369 = vunpack.c.l.b16 %v1273
    %v1370 = vunpack.c.l.b16 %v1274
    %v1371 = vunpack.c.l.b16 %v1275
    %v1372 = vunpack.c.l.b16 %v1276
    %v1373 = vunpack.c.l.b16 %v1277
    %v1374 = vunpack.c.l.b16 %v1278
    %v1375 = vunpack.c.l.b16 %v1279
    %v1376 = vunpack.c.l.b16 %v1280
    %v1377 = vunpack.c.l.b16 %v1281
    %v1378 = vunpack.c.l.b16 %v1282
    %v1379 = vunpack.c.l.b16 %v1283
    %v1380 = vunpack.c.l.b16 %v1284
    %v1381 = vunpack.c.l.b16 %v1285
    %v1382 = vunpack.c.l.b16 %v1286
    %v1383 = vunpack.c.l.b16 %v1287
    %v1384 = vunpack.c.l.b16 %v1288
    %v1385 = vunpack.c.l.b16 %v1289
    %v1386 = vunpack.c.l.b16 %v1290
    %v1387 = vpack.c.b16 %v1340, %v1339
    %v1388 = vpack.c.b16 %v1342, %v1341
    %v1389 = vpack.c.b16 %v1344, %v1343
    %v1390 = vpack.c.b16 %v1346, %v1345
    %v1391 = vpack.c.b16 %v1348, %v1347
    %v1392 = vpack.c.b16 %v1350, %v1349
    %v1393 = vpack.c.b16 %v1352, %v1351
    %v1394 = vpack.c.b16 %v1354, %v1353
    %v1395 = vpack.c.b16 %v1356, %v1355
    %v1396 = vpack.c.b16 %v1358, %v1357
    %v1397 = vpack.c.b16 %v1360, %v1359
    %v1398 = vpack.c.b16 %v1362, %v1361
    %v1399 = vpack.c.b16 %v1364, %v1363
    %v1400 = vpack.c.b16 %v1366, %v1365
    %v1401 = vpack.c.b16 %v1368, %v1367
    %v1402 = vpack.c.b16 %v1370, %v1369
    %v1403 = vpack.c.b16 %v1372, %v1371
    %v1404 = vpack.c.b16 %v1374, %v1373
    %v1405 = vpack.c.b16 %v1376, %v1375
    %v1406 = vpack.c.b16 %v1378, %v1377
    %v1407 = vpack.c.b16 %v1380, %v1379
    %v1408 = vpack.c.b16 %v1382, %v1381
    %v1409 = vpack.c.b16 %v1384, %v1383
    %v1410 = vpack.c.b16 %v1386, %v1385
    %1435 = vmatprep.subr.bf16.mxu0 0
    %1436 = vmatpush1.bf16.msra.mxu0 %v1387
    %1437 = vmatprep.subr.bf16.mxu0 0
    %1438 = vmatpush1.bf16.msra.mxu0 %v1388
    %1439 = vmatprep.subr.bf16.mxu0 0
    %1440 = vmatpush1.bf16.msra.mxu0 %v1389
    %1441 = vmatprep.subr.bf16.mxu0 0
    %1442 = vmatpush1.bf16.msra.mxu0 %v1390
    %1443 = vmatprep.subr.bf16.mxu0 0
    %1444 = vmatpush1.bf16.msra.mxu0 %v1391
    %1445 = vmatprep.subr.bf16.mxu0 0
    %1446 = vmatpush1.bf16.msra.mxu0 %v1392
    %1447 = vmatprep.subr.bf16.mxu0 0
    %1448 = vmatpush1.bf16.msra.mxu0 %v1393
    %1449 = vmatprep.subr.bf16.mxu0 0
    %1450 = vmatpush1.bf16.msra.mxu0 %v1394
    %1451 = vmatprep.subr.bf16.mxu0 0
    %1452 = vmatpush1.bf16.msra.mxu0 %v1395
    %1453 = vmatprep.subr.bf16.mxu0 0
    %1454 = vmatpush1.bf16.msra.mxu0 %v1396
    %1455 = vmatprep.subr.bf16.mxu0 0
    %1456 = vmatpush1.bf16.msra.mxu0 %v1397
    %1457 = vmatprep.subr.bf16.mxu0 0
    %1458 = vmatpush1.bf16.msra.mxu0 %v1398
    %1459 = vmatprep.subr.bf16.mxu0 0
    %1460 = vmatpush1.bf16.msra.mxu0 %v1399
    %1461 = vmatprep.subr.bf16.mxu0 0
    %1462 = vmatpush1.bf16.msra.mxu0 %v1400
    %1463 = vmatprep.subr.bf16.mxu0 0
    %1464 = vmatpush1.bf16.msra.mxu0 %v1401
    %1465 = vmatprep.subr.bf16.mxu0 0
    %1466 = vmatpush1.bf16.msra.mxu0 %v1402
    %1467 = vmatprep.mubr.bf16.mxu0 %v1241
    %1468 = vmatmul.mubr.bf16.gmra.mrb[0].mxu0 %v1240
    %v1469 = vpop.f32.mrb[0].mxu0
    %v1470 = vadd.f32 0.0, %v1469
    %v1471 = vpop.f32.mrb[0].mxu0
    %v1472 = vpop.f32.mrb[0].mxu0
    %v1473 = vpop.f32.mrb[0].mxu0
    %1474 = vdwg.mxu0
    %1475 = vmatprep.subr.bf16.mxu0 0
    %1476 = vmatpush1.bf16.msra.mxu0 %v1403
    %1477 = vmatprep.subr.bf16.mxu0 0
    %1478 = vmatpush1.bf16.msra.mxu0 %v1404
    %1479 = vmatprep.subr.bf16.mxu0 0
    %1480 = vmatpush1.bf16.msra.mxu0 %v1405
    %1481 = vmatprep.subr.bf16.mxu0 0
    %1482 = vmatpush1.bf16.msra.mxu0 %v1406
    %1483 = vmatprep.subr.bf16.mxu0 0
    %1484 = vmatpush1.bf16.msra.mxu0 %v1407
    %1485 = vmatprep.subr.bf16.mxu0 0
    %1486 = vmatpush1.bf16.msra.mxu0 %v1408
    %1487 = vmatprep.subr.bf16.mxu0 0
    %1488 = vmatpush1.bf16.msra.mxu0 %v1409
    %1489 = vmatprep.subr.bf16.mxu0 0
    %1490 = vmatpush1.bf16.msra.mxu0 %v1410
    %1491 = vmatprep.subr.bf16.mxu0 0
    %1492 = vmatpush1.bf16.msra.mxu0 0
    %1493 = vmatprep.subr.bf16.mxu0 0
    %1494 = vmatpush1.bf16.msra.mxu0 0
    %1495 = vmatprep.subr.bf16.mxu0 0
    %1496 = vmatpush1.bf16.msra.mxu0 0
    %1497 = vmatprep.subr.bf16.mxu0 0
    %1498 = vmatpush1.bf16.msra.mxu0 0
    %1499 = vmatprep.subr.bf16.mxu0 0
    %1500 = vmatpush1.bf16.msra.mxu0 0
    %1501 = vmatprep.subr.bf16.mxu0 0
    %1502 = vmatpush1.bf16.msra.mxu0 0
    %1503 = vmatprep.subr.bf16.mxu0 0
    %1504 = vmatpush1.bf16.msra.mxu0 0
    %1505 = vmatprep.subr.bf16.mxu0 0
    %1506 = vmatpush1.bf16.msra.mxu0 0
    %1507 = vmatprep.mubr.bf16.mxu0 0
    %1508 = vmatmul.mubr.bf16.gmra.mrb[0].mxu0 %v1242
    %v1509 = vpop.f32.mrb[0].mxu0
    %v1510 = vadd.f32 %v1470, %v1509
    %v1511 = vpop.f32.mrb[0].mxu0
    %v1512 = vpop.f32.mrb[0].mxu0
    %v1513 = vpop.f32.mrb[0].mxu0
    %1514 = vdwg.mxu0
    %v1515 = vld [vmem:[#allocation6 + $0x540] sm:$0xff]
    %v1516 = vld [vmem:[#allocation6 + $0x548] sm:$0xf]
    %v1517 = vld [vmem:[#allocation6 + $0x54c] sm:$0xff]
    %v1518 = vld [vmem:[#allocation6 + $0x554] sm:$0xf]
    %v1523 = vunpack.c.l.b16 %v1515
    %v1524 = vunpack.c.h.b16 %v1515
    %v1525 = vunpack.c.l.b16 %v1516
    %v1526 = vunpack.c.l.b16 %v1517
    %v1527 = vunpack.c.h.b16 %v1517
    %v1528 = vunpack.c.l.b16 %v1518
    %v1529 = vpack.c.b16 %v1526, %v1523
    %v1530 = vpack.c.b16 %v1527, %v1524
    %v1531 = vpack.c.b16 %v1528, %v1525
    %1535 = vmatprep.subr.bf16.mxu0 %v1241
    %1536 = vmatpush1.bf16.xpose.msra.mxu0 %v1240
    %1537 = vmatprep.subr.bf16.mxu0 0
    %1538 = vmatpush1.bf16.xpose.msra.mxu0 0
    %1539 = vmatprep.subr.bf16.mxu0 0
    %1540 = vmatpush1.bf16.xpose.msra.mxu0 0
    %1541 = vmatprep.subr.bf16.mxu0 0
    %1542 = vmatpush1.bf16.xpose.msra.mxu0 0
    %1543 = vmatprep.subr.bf16.mxu0 0
    %1544 = vmatpush1.bf16.xpose.msra.mxu0 0
    %1545 = vmatprep.subr.bf16.mxu0 0
    %1546 = vmatpush1.bf16.xpose.msra.mxu0 0
    %1547 = vmatprep.subr.bf16.mxu0 0
    %1548 = vmatpush1.bf16.xpose.msra.mxu0 0
    %1549 = vmatprep.subr.bf16.mxu0 0
    %1550 = vmatpush1.bf16.xpose.msra.mxu0 0
    %1551 = vmatprep.subr.bf16.mxu0 0
    %1552 = vmatpush1.bf16.xpose.msra.mxu0 0
    %1553 = vmatprep.subr.bf16.mxu0 0
    %1554 = vmatpush1.bf16.xpose.msra.mxu0 0
    %1555 = vmatprep.subr.bf16.mxu0 0
    %1556 = vmatpush1.bf16.xpose.msra.mxu0 0
    %1557 = vmatprep.subr.bf16.mxu0 0
    %1558 = vmatpush1.bf16.xpose.msra.mxu0 0
    %1559 = vmatprep.subr.bf16.mxu0 0
    %1560 = vmatpush1.bf16.xpose.msra.mxu0 0
    %1561 = vmatprep.subr.bf16.mxu0 0
    %1562 = vmatpush1.bf16.xpose.msra.mxu0 0
    %1563 = vmatprep.subr.bf16.mxu0 0
    %1564 = vmatpush1.bf16.xpose.msra.mxu0 0
    %1565 = vmatprep.subr.bf16.mxu0 0
    %1566 = vmatpush1.bf16.xpose.msra.mxu0 0
    %1567 = vmatprep.mubr.bf16.mxu0 %v1530
    %1568 = vmatmul.mubr.bf16.gmra.mrb[0].mxu0 %v1529
    %v1569 = vpop.f32.mrb[0].mxu0
    %v1570 = vadd.f32 0.0, %v1569
    %v1571 = vpop.f32.mrb[0].mxu0
    %v1572 = vpop.f32.mrb[0].mxu0
    %v1573 = vpop.f32.mrb[0].mxu0
    %1574 = vdwg.mxu0
    %1575 = vmatprep.subr.bf16.mxu0 0
    %1576 = vmatpush1.bf16.xpose.msra.mxu0 %v1242
    %1577 = vmatprep.subr.bf16.mxu0 0
    %1578 = vmatpush1.bf16.xpose.msra.mxu0 0
    %1579 = vmatprep.subr.bf16.mxu0 0
    %1580 = vmatpush1.bf16.xpose.msra.mxu0 0
    %1581 = vmatprep.subr.bf16.mxu0 0
    %1582 = vmatpush1.bf16.xpose.msra.mxu0 0
    %1583 = vmatprep.subr.bf16.mxu0 0
    %1584 = vmatpush1.bf16.xpose.msra.mxu0 0
    %1585 = vmatprep.subr.bf16.mxu0 0
    %1586 = vmatpush1.bf16.xpose.msra.mxu0 0
    %1587 = vmatprep.subr.bf16.mxu0 0
    %1588 = vmatpush1.bf16.xpose.msra.mxu0 0
    %1589 = vmatprep.subr.bf16.mxu0 0
    %1590 = vmatpush1.bf16.xpose.msra.mxu0 0
    %1591 = vmatprep.subr.bf16.mxu0 0
    %1592 = vmatpush1.bf16.xpose.msra.mxu0 0
    %1593 = vmatprep.subr.bf16.mxu0 0
    %1594 = vmatpush1.bf16.xpose.msra.mxu0 0
    %1595 = vmatprep.subr.bf16.mxu0 0
    %1596 = vmatpush1.bf16.xpose.msra.mxu0 0
    %1597 = vmatprep.subr.bf16.mxu0 0
    %1598 = vmatpush1.bf16.xpose.msra.mxu0 0
    %1599 = vmatprep.subr.bf16.mxu0 0
    %1600 = vmatpush1.bf16.xpose.msra.mxu0 0
    %1601 = vmatprep.subr.bf16.mxu0 0
    %1602 = vmatpush1.bf16.xpose.msra.mxu0 0
    %1603 = vmatprep.subr.bf16.mxu0 0
    %1604 = vmatpush1.bf16.xpose.msra.mxu0 0
    %1605 = vmatprep.subr.bf16.mxu0 0
    %1606 = vmatpush1.bf16.xpose.msra.mxu0 0
    %1607 = vmatprep.mubr.bf16.mxu0 0
    %1608 = vmatmul.mubr.bf16.gmra.mrb[0].mxu0 %v1531
    %v1609 = vpop.f32.mrb[0].mxu0
    %v1610 = vadd.f32 %v1570, %v1609
    %v1611 = vpop.f32.mrb[0].mxu0
    %v1612 = vpop.f32.mrb[0].mxu0
    %v1613 = vpop.f32.mrb[0].mxu0
    %1614 = vdwg.mxu0
    %1616 = vset.pattern.permute.xlu0 0
    %1617 = vperm.xlu0 %1616, %v1510
    %v1618 = vpop.permute.xlu0 %1617
    %v1620 = vlaneseq
    %v1621 = vshrl.u32 %v1620, 7
    %v1622 = vsub.s32 0, %v1621
    %v1623 = vrot.slane %v1610, %v1622
    %v1624 = vadd.f32 %v1618, %v1623
    %vm1625 = vcmp.gt.f32.partialorder %v1624, 0.0
    %v1626 = vmul.f32 %v1624, 0.2
    %v1627 = vsel %vm1625, %v1624, %v1626
    %v1628 = vsel %vm997, %v1627, -9e+15
    %vm1629 = vcmask 36864
    %v1630 = vsel %vm1629, %v1628, -inf
    %1631 = vmax.xlane.f32.xlu0 %v1630
    %v1632 = vpop.xlane.xlu0 %1631
    %v1633 = vsub.f32 %v1628, %v1632
    %v1634 = vmul.f32 %v1633, 1.442695
    %v1635 = vpow.pop %v1634
    %v1636 = vsel %vm1629, %v1635, 0.0
    %1637 = vadd.xlane.f32.xlu0 %v1636
    %v1638 = vpop.xlane.xlu0 %1637
    %v1639 = vrcp.pop %v1638
    %v1640 = vmul.f32 %v1635, %v1639
    %v1641 = vpack.c.bf16 %v1640, %v1640
    %vm1642 = vcmask 39936
    %v1644 = vsel %vm1642, %v1641, 0
    %vm1646 = vcmask 1041408
    %vm1647 = vcmask 1042432
    %v1648 = vsel %vm1646, 4294967295, 65535
    %v1649 = vsel %vm1647, %v1648, 0
    %v1651 = vand.u32 %v1240, %v1649
    %1653 = vmatprep.subr.bf16.mxu0 0
    %1654 = vmatpush1.bf16.msra.mxu0 %v1651
    %1655 = vmatprep.subr.bf16.mxu0 0
    %1656 = vmatpush1.bf16.msra.mxu0 0
    %1657 = vmatprep.subr.bf16.mxu0 0
    %1658 = vmatpush1.bf16.msra.mxu0 0
    %1659 = vmatprep.subr.bf16.mxu0 0
    %1660 = vmatpush1.bf16.msra.mxu0 0
    %1661 = vmatprep.subr.bf16.mxu0 0
    %1662 = vmatpush1.bf16.msra.mxu0 0
    %1663 = vmatprep.subr.bf16.mxu0 0
    %1664 = vmatpush1.bf16.msra.mxu0 0
    %1665 = vmatprep.subr.bf16.mxu0 0
    %1666 = vmatpush1.bf16.msra.mxu0 0
    %1667 = vmatprep.subr.bf16.mxu0 0
    %1668 = vmatpush1.bf16.msra.mxu0 0
    %1669 = vmatprep.subr.bf16.mxu0 0
    %1670 = vmatpush1.bf16.msra.mxu0 0
    %1671 = vmatprep.subr.bf16.mxu0 0
    %1672 = vmatpush1.bf16.msra.mxu0 0
    %1673 = vmatprep.subr.bf16.mxu0 0
    %1674 = vmatpush1.bf16.msra.mxu0 0
    %1675 = vmatprep.subr.bf16.mxu0 0
    %1676 = vmatpush1.bf16.msra.mxu0 0
    %1677 = vmatprep.subr.bf16.mxu0 0
    %1678 = vmatpush1.bf16.msra.mxu0 0
    %1679 = vmatprep.subr.bf16.mxu0 0
    %1680 = vmatpush1.bf16.msra.mxu0 0
    %1681 = vmatprep.subr.bf16.mxu0 0
    %1682 = vmatpush1.bf16.msra.mxu0 0
    %1683 = vmatprep.subr.bf16.mxu0 0
    %1684 = vmatpush1.bf16.msra.mxu0 0
    %1685 = vmatprep.mubr.bf16.mxu0 0
    %1686 = vmatmul.mubr.bf16.gmra.mrb[0].mxu0 %v1644
    %v1687 = vpop.f32.mrb[0].mxu0
    %v1688 = vadd.f32 0.0, %v1687
    %v1689 = vpop.f32.mrb[0].mxu0
    %v1690 = vpop.f32.mrb[0].mxu0
    %v1691 = vpop.f32.mrb[0].mxu0
    %1692 = vdwg.mxu0
    %vm1693 = vcmp.gt.f32.partialorder %v1688, 0.0
    %v1694 = vmin.f32 %v1688, 0.0
    %v1695 = vmul.f32 %v1694, 1.442695
    %v1696 = vpow.pop %v1695
    %v1697 = vsub.f32 %v1696, 1.0
    %v1698 = vsel %vm1693, %v1688, %v1697
    %v1699 = vpack.c.bf16 %v1698, %v1698
    %vm1700 = vcmask 1042432
    %vm1701 = vsmask.f32 2304
    %vm1702 = vmand %vm1700, %vm1701
    %v1703 = vld [vmem:[#allocation2] sm:$0x7]
    %v1704 = vsel %vm1702, %v1699, %v1703
    %1705 = vst [vmem:[#allocation2] sm:$0x7] %v1704
    %1706 = vset.pattern.permute.xlu0 1
    %1707 = vperm.xlu0 %1706, %v1510
    %v1708 = vpop.permute.xlu0 %1707
    %v1710 = vlaneseq
    %v1711 = vshrl.u32 %v1710, 7
    %v1712 = vsub.s32 1, %v1711
    %v1713 = vrot.slane %v1610, %v1712
    %v1714 = vadd.f32 %v1708, %v1713
    %vm1715 = vcmp.gt.f32.partialorder %v1714, 0.0
    %v1716 = vmul.f32 %v1714, 0.2
    %v1717 = vsel %vm1715, %v1714, %v1716
    %v1718 = vsel %vm997, %v1717, -9e+15
    %v1719 = vsel %vm1629, %v1718, -inf
    %1720 = vmax.xlane.f32.xlu0 %v1719
    %v1721 = vpop.xlane.xlu0 %1720
    %v1722 = vsub.f32 %v1718, %v1721
    %v1723 = vmul.f32 %v1722, 1.442695
    %v1724 = vpow.pop %v1723
    %v1725 = vsel %vm1629, %v1724, 0.0
    %1726 = vadd.xlane.f32.xlu0 %v1725
    %v1727 = vpop.xlane.xlu0 %1726
    %v1728 = vrcp.pop %v1727
    %v1729 = vmul.f32 %v1724, %v1728
    %v1730 = vpack.c.bf16 %v1729, %v1729
    %v1732 = vsel %vm1642, %v1730, 0
    %v1735 = vand.u32 %v1241, %v1649
    %1737 = vmatprep.subr.bf16.mxu0 0
    %1738 = vmatpush1.bf16.msra.mxu0 %v1735
    %1739 = vmatprep.subr.bf16.mxu0 0
    %1740 = vmatpush1.bf16.msra.mxu0 0
    %1741 = vmatprep.subr.bf16.mxu0 0
    %1742 = vmatpush1.bf16.msra.mxu0 0
    %1743 = vmatprep.subr.bf16.mxu0 0
    %1744 = vmatpush1.bf16.msra.mxu0 0
    %1745 = vmatprep.subr.bf16.mxu0 0
    %1746 = vmatpush1.bf16.msra.mxu0 0
    %1747 = vmatprep.subr.bf16.mxu0 0
    %1748 = vmatpush1.bf16.msra.mxu0 0
    %1749 = vmatprep.subr.bf16.mxu0 0
    %1750 = vmatpush1.bf16.msra.mxu0 0
    %1751 = vmatprep.subr.bf16.mxu0 0
    %1752 = vmatpush1.bf16.msra.mxu0 0
    %1753 = vmatprep.subr.bf16.mxu0 0
    %1754 = vmatpush1.bf16.msra.mxu0 0
    %1755 = vmatprep.subr.bf16.mxu0 0
    %1756 = vmatpush1.bf16.msra.mxu0 0
    %1757 = vmatprep.subr.bf16.mxu0 0
    %1758 = vmatpush1.bf16.msra.mxu0 0
    %1759 = vmatprep.subr.bf16.mxu0 0
    %1760 = vmatpush1.bf16.msra.mxu0 0
    %1761 = vmatprep.subr.bf16.mxu0 0
    %1762 = vmatpush1.bf16.msra.mxu0 0
    %1763 = vmatprep.subr.bf16.mxu0 0
    %1764 = vmatpush1.bf16.msra.mxu0 0
    %1765 = vmatprep.subr.bf16.mxu0 0
    %1766 = vmatpush1.bf16.msra.mxu0 0
    %1767 = vmatprep.subr.bf16.mxu0 0
    %1768 = vmatpush1.bf16.msra.mxu0 0
    %1769 = vmatprep.mubr.bf16.mxu0 0
    %1770 = vmatmul.mubr.bf16.gmra.mrb[0].mxu0 %v1732
    %v1771 = vpop.f32.mrb[0].mxu0
    %v1772 = vadd.f32 0.0, %v1771
    %v1773 = vpop.f32.mrb[0].mxu0
    %v1774 = vpop.f32.mrb[0].mxu0
    %v1775 = vpop.f32.mrb[0].mxu0
    %1776 = vdwg.mxu0
    %vm1777 = vcmp.gt.f32.partialorder %v1772, 0.0
    %v1778 = vmin.f32 %v1772, 0.0
    %v1779 = vmul.f32 %v1778, 1.442695
    %v1780 = vpow.pop %v1779
    %v1781 = vsub.f32 %v1780, 1.0
    %v1782 = vsel %vm1777, %v1772, %v1781
    %v1783 = vpack.c.bf16 %v1782, %v1782
    %v1784 = vld [vmem:[#allocation2 + $0x4] sm:$0x7]
    %v1785 = vsel %vm1702, %v1783, %v1784
    %1786 = vst [vmem:[#allocation2 + $0x4] sm:$0x7] %v1785
    %1787 = vset.pattern.permute.xlu0 2
    %1788 = vperm.xlu0 %1787, %v1510
    %v1789 = vpop.permute.xlu0 %1788
    %v1791 = vlaneseq
    %v1792 = vshrl.u32 %v1791, 7
    %v1793 = vsub.s32 2, %v1792
    %v1794 = vrot.slane %v1610, %v1793
    %v1795 = vadd.f32 %v1789, %v1794
    %vm1796 = vcmp.gt.f32.partialorder %v1795, 0.0
    %v1797 = vmul.f32 %v1795, 0.2
    %v1798 = vsel %vm1796, %v1795, %v1797
    %v1799 = vsel %vm997, %v1798, -9e+15
    %v1800 = vsel %vm1629, %v1799, -inf
    %1801 = vmax.xlane.f32.xlu0 %v1800
    %v1802 = vpop.xlane.xlu0 %1801
    %v1803 = vsub.f32 %v1799, %v1802
    %v1804 = vmul.f32 %v1803, 1.442695
    %v1805 = vpow.pop %v1804
    %v1806 = vsel %vm1629, %v1805, 0.0
    %1807 = vadd.xlane.f32.xlu0 %v1806
    %v1808 = vpop.xlane.xlu0 %1807
    %v1809 = vrcp.pop %v1808
    %v1810 = vmul.f32 %v1805, %v1809
    %v1811 = vpack.c.bf16 %v1810, %v1810
    %v1813 = vsel %vm1642, %v1811, 0
    %v1816 = vand.u32 %v1242, %v1649
    %1818 = vmatprep.subr.bf16.mxu0 0
    %1819 = vmatpush1.bf16.msra.mxu0 %v1816
    %1820 = vmatprep.subr.bf16.mxu0 0
    %1821 = vmatpush1.bf16.msra.mxu0 0
    %1822 = vmatprep.subr.bf16.mxu0 0
    %1823 = vmatpush1.bf16.msra.mxu0 0
    %1824 = vmatprep.subr.bf16.mxu0 0
    %1825 = vmatpush1.bf16.msra.mxu0 0
    %1826 = vmatprep.subr.bf16.mxu0 0
    %1827 = vmatpush1.bf16.msra.mxu0 0
    %1828 = vmatprep.subr.bf16.mxu0 0
    %1829 = vmatpush1.bf16.msra.mxu0 0
    %1830 = vmatprep.subr.bf16.mxu0 0
    %1831 = vmatpush1.bf16.msra.mxu0 0
    %1832 = vmatprep.subr.bf16.mxu0 0
    %1833 = vmatpush1.bf16.msra.mxu0 0
    %1834 = vmatprep.subr.bf16.mxu0 0
    %1835 = vmatpush1.bf16.msra.mxu0 0
    %1836 = vmatprep.subr.bf16.mxu0 0
    %1837 = vmatpush1.bf16.msra.mxu0 0
    %1838 = vmatprep.subr.bf16.mxu0 0
    %1839 = vmatpush1.bf16.msra.mxu0 0
    %1840 = vmatprep.subr.bf16.mxu0 0
    %1841 = vmatpush1.bf16.msra.mxu0 0
    %1842 = vmatprep.subr.bf16.mxu0 0
    %1843 = vmatpush1.bf16.msra.mxu0 0
    %1844 = vmatprep.subr.bf16.mxu0 0
    %1845 = vmatpush1.bf16.msra.mxu0 0
    %1846 = vmatprep.subr.bf16.mxu0 0
    %1847 = vmatpush1.bf16.msra.mxu0 0
    %1848 = vmatprep.subr.bf16.mxu0 0
    %1849 = vmatpush1.bf16.msra.mxu0 0
    %1850 = vmatprep.mubr.bf16.mxu0 0
    %1851 = vmatmul.mubr.bf16.gmra.mrb[0].mxu0 %v1813
    %v1852 = vpop.f32.mrb[0].mxu0
    %v1853 = vadd.f32 0.0, %v1852
    %v1854 = vpop.f32.mrb[0].mxu0
    %v1855 = vpop.f32.mrb[0].mxu0
    %v1856 = vpop.f32.mrb[0].mxu0
    %1857 = vdwg.mxu0
    %vm1858 = vcmp.gt.f32.partialorder %v1853, 0.0
    %v1859 = vmin.f32 %v1853, 0.0
    %v1860 = vmul.f32 %v1859, 1.442695
    %v1861 = vpow.pop %v1860
    %v1862 = vsub.f32 %v1861, 1.0
    %v1863 = vsel %vm1858, %v1853, %v1862
    %v1864 = vpack.c.bf16 %v1863, %v1863
    %v1865 = vld [vmem:[#allocation2 + $0x8] sm:$0x7]
    %v1866 = vsel %vm1702, %v1864, %v1865
    %1867 = vst [vmem:[#allocation2 + $0x8] sm:$0x7] %v1866
    %v1868 = vld [vmem:[#allocation2] sm:$0x77]
    %v1869 = vld [vmem:[#allocation2 + $0x8] sm:$0x7]
    %v1870 = vld [vmem:[#allocation6 + $0xc0] sm:$0xf]
    %v1871 = vld [vmem:[#allocation6 + $0xcc] sm:$0xf]
    %v1872 = vld [vmem:[#allocation6 + $0xd8] sm:$0xf]
    %v1873 = vld [vmem:[#allocation6 + $0xe4] sm:$0xf]
    %v1874 = vld [vmem:[#allocation6 + $0xf0] sm:$0xf]
    %v1875 = vld [vmem:[#allocation6 + $0xfc] sm:$0xf]
    %v1876 = vld [vmem:[#allocation6 + $0x108] sm:$0xf]
    %v1877 = vld [vmem:[#allocation6 + $0x114] sm:$0xf]
    %v1878 = vld [vmem:[#allocation6 + $0x120] sm:$0xf]
    %v1879 = vld [vmem:[#allocation6 + $0x12c] sm:$0xf]
    %v1880 = vld [vmem:[#allocation6 + $0x138] sm:$0xf]
    %v1881 = vld [vmem:[#allocation6 + $0x144] sm:$0xf]
    %v1882 = vld [vmem:[#allocation6 + $0x150] sm:$0xf]
    %v1883 = vld [vmem:[#allocation6 + $0x15c] sm:$0xf]
    %v1884 = vld [vmem:[#allocation6 + $0x168] sm:$0xf]
    %v1885 = vld [vmem:[#allocation6 + $0x174] sm:$0xf]
    %v1886 = vld [vmem:[#allocation6 + $0x180] sm:$0xf]
    %v1887 = vld [vmem:[#allocation6 + $0x18c] sm:$0xf]
    %v1888 = vld [vmem:[#allocation6 + $0x198] sm:$0xf]
    %v1889 = vld [vmem:[#allocation6 + $0x1a4] sm:$0xf]
    %v1890 = vld [vmem:[#allocation6 + $0x1b0] sm:$0xf]
    %v1891 = vld [vmem:[#allocation6 + $0x1bc] sm:$0xf]
    %v1892 = vld [vmem:[#allocation6 + $0x1c8] sm:$0xf]
    %v1893 = vld [vmem:[#allocation6 + $0x1d4] sm:$0xf]
    %v1894 = vld [vmem:[#allocation6 + $0x1e0] sm:$0xf]
    %v1895 = vld [vmem:[#allocation6 + $0x1ec] sm:$0xf]
    %v1896 = vld [vmem:[#allocation6 + $0x1f8] sm:$0xf]
    %v1897 = vld [vmem:[#allocation6 + $0x204] sm:$0xf]
    %v1898 = vld [vmem:[#allocation6 + $0x210] sm:$0xf]
    %v1899 = vld [vmem:[#allocation6 + $0x21c] sm:$0xf]
    %v1900 = vld [vmem:[#allocation6 + $0x228] sm:$0xf]
    %v1901 = vld [vmem:[#allocation6 + $0x234] sm:$0xf]
    %v1902 = vld [vmem:[#allocation6 + $0x240] sm:$0xf]
    %v1903 = vld [vmem:[#allocation6 + $0x24c] sm:$0xf]
    %v1904 = vld [vmem:[#allocation6 + $0x258] sm:$0xf]
    %v1905 = vld [vmem:[#allocation6 + $0x264] sm:$0xf]
    %v1906 = vld [vmem:[#allocation6 + $0x270] sm:$0xf]
    %v1907 = vld [vmem:[#allocation6 + $0x27c] sm:$0xf]
    %v1908 = vld [vmem:[#allocation6 + $0x288] sm:$0xf]
    %v1909 = vld [vmem:[#allocation6 + $0x294] sm:$0xf]
    %v1910 = vld [vmem:[#allocation6 + $0x2a0] sm:$0xf]
    %v1911 = vld [vmem:[#allocation6 + $0x2ac] sm:$0xf]
    %v1912 = vld [vmem:[#allocation6 + $0x2b8] sm:$0xf]
    %v1913 = vld [vmem:[#allocation6 + $0x2c4] sm:$0xf]
    %v1914 = vld [vmem:[#allocation6 + $0x2d0] sm:$0xf]
    %v1915 = vld [vmem:[#allocation6 + $0x2dc] sm:$0xf]
    %v1916 = vld [vmem:[#allocation6 + $0x2e8] sm:$0xf]
    %v1917 = vld [vmem:[#allocation6 + $0x2f4] sm:$0xf]
    %v1920 = vunpack.c.l.b16 %v1868
    %v1921 = vunpack.c.h.b16 %v1868
    %v1922 = vunpack.c.l.b16 %v1869
    %v1923 = vpack.c.b16 %v1920, %v1920
    %v1924 = vpack.c.b16 %v1921, %v1921
    %v1925 = vpack.c.b16 %v1922, %v1922
    %v1977 = vunpack.c.l.b16 %v1870
    %v1978 = vunpack.c.l.b16 %v1871
    %v1979 = vunpack.c.l.b16 %v1872
    %v1980 = vunpack.c.l.b16 %v1873
    %v1981 = vunpack.c.l.b16 %v1874
    %v1982 = vunpack.c.l.b16 %v1875
    %v1983 = vunpack.c.l.b16 %v1876
    %v1984 = vunpack.c.l.b16 %v1877
    %v1985 = vunpack.c.l.b16 %v1878
    %v1986 = vunpack.c.l.b16 %v1879
    %v1987 = vunpack.c.l.b16 %v1880
    %v1988 = vunpack.c.l.b16 %v1881
    %v1989 = vunpack.c.l.b16 %v1882
    %v1990 = vunpack.c.l.b16 %v1883
    %v1991 = vunpack.c.l.b16 %v1884
    %v1992 = vunpack.c.l.b16 %v1885
    %v1993 = vunpack.c.l.b16 %v1886
    %v1994 = vunpack.c.l.b16 %v1887
    %v1995 = vunpack.c.l.b16 %v1888
    %v1996 = vunpack.c.l.b16 %v1889
    %v1997 = vunpack.c.l.b16 %v1890
    %v1998 = vunpack.c.l.b16 %v1891
    %v1999 = vunpack.c.l.b16 %v1892
    %v2000 = vunpack.c.l.b16 %v1893
    %v2001 = vunpack.c.l.b16 %v1894
    %v2002 = vunpack.c.l.b16 %v1895
    %v2003 = vunpack.c.l.b16 %v1896
    %v2004 = vunpack.c.l.b16 %v1897
    %v2005 = vunpack.c.l.b16 %v1898
    %v2006 = vunpack.c.l.b16 %v1899
    %v2007 = vunpack.c.l.b16 %v1900
    %v2008 = vunpack.c.l.b16 %v1901
    %v2009 = vunpack.c.l.b16 %v1902
    %v2010 = vunpack.c.l.b16 %v1903
    %v2011 = vunpack.c.l.b16 %v1904
    %v2012 = vunpack.c.l.b16 %v1905
    %v2013 = vunpack.c.l.b16 %v1906
    %v2014 = vunpack.c.l.b16 %v1907
    %v2015 = vunpack.c.l.b16 %v1908
    %v2016 = vunpack.c.l.b16 %v1909
    %v2017 = vunpack.c.l.b16 %v1910
    %v2018 = vunpack.c.l.b16 %v1911
    %v2019 = vunpack.c.l.b16 %v1912
    %v2020 = vunpack.c.l.b16 %v1913
    %v2021 = vunpack.c.l.b16 %v1914
    %v2022 = vunpack.c.l.b16 %v1915
    %v2023 = vunpack.c.l.b16 %v1916
    %v2024 = vunpack.c.l.b16 %v1917
    %v2025 = vpack.c.b16 %v1978, %v1977
    %v2026 = vpack.c.b16 %v1980, %v1979
    %v2027 = vpack.c.b16 %v1982, %v1981
    %v2028 = vpack.c.b16 %v1984, %v1983
    %v2029 = vpack.c.b16 %v1986, %v1985
    %v2030 = vpack.c.b16 %v1988, %v1987
    %v2031 = vpack.c.b16 %v1990, %v1989
    %v2032 = vpack.c.b16 %v1992, %v1991
    %v2033 = vpack.c.b16 %v1994, %v1993
    %v2034 = vpack.c.b16 %v1996, %v1995
    %v2035 = vpack.c.b16 %v1998, %v1997
    %v2036 = vpack.c.b16 %v2000, %v1999
    %v2037 = vpack.c.b16 %v2002, %v2001
    %v2038 = vpack.c.b16 %v2004, %v2003
    %v2039 = vpack.c.b16 %v2006, %v2005
    %v2040 = vpack.c.b16 %v2008, %v2007
    %v2041 = vpack.c.b16 %v2010, %v2009
    %v2042 = vpack.c.b16 %v2012, %v2011
    %v2043 = vpack.c.b16 %v2014, %v2013
    %v2044 = vpack.c.b16 %v2016, %v2015
    %v2045 = vpack.c.b16 %v2018, %v2017
    %v2046 = vpack.c.b16 %v2020, %v2019
    %v2047 = vpack.c.b16 %v2022, %v2021
    %v2048 = vpack.c.b16 %v2024, %v2023
    %2073 = vmatprep.subr.bf16.mxu0 0
    %2074 = vmatpush1.bf16.msra.mxu0 %v2025
    %2075 = vmatprep.subr.bf16.mxu0 0
    %2076 = vmatpush1.bf16.msra.mxu0 %v2026
    %2077 = vmatprep.subr.bf16.mxu0 0
    %2078 = vmatpush1.bf16.msra.mxu0 %v2027
    %2079 = vmatprep.subr.bf16.mxu0 0
    %2080 = vmatpush1.bf16.msra.mxu0 %v2028
    %2081 = vmatprep.subr.bf16.mxu0 0
    %2082 = vmatpush1.bf16.msra.mxu0 %v2029
    %2083 = vmatprep.subr.bf16.mxu0 0
    %2084 = vmatpush1.bf16.msra.mxu0 %v2030
    %2085 = vmatprep.subr.bf16.mxu0 0
    %2086 = vmatpush1.bf16.msra.mxu0 %v2031
    %2087 = vmatprep.subr.bf16.mxu0 0
    %2088 = vmatpush1.bf16.msra.mxu0 %v2032
    %2089 = vmatprep.subr.bf16.mxu0 0
    %2090 = vmatpush1.bf16.msra.mxu0 %v2033
    %2091 = vmatprep.subr.bf16.mxu0 0
    %2092 = vmatpush1.bf16.msra.mxu0 %v2034
    %2093 = vmatprep.subr.bf16.mxu0 0
    %2094 = vmatpush1.bf16.msra.mxu0 %v2035
    %2095 = vmatprep.subr.bf16.mxu0 0
    %2096 = vmatpush1.bf16.msra.mxu0 %v2036
    %2097 = vmatprep.subr.bf16.mxu0 0
    %2098 = vmatpush1.bf16.msra.mxu0 %v2037
    %2099 = vmatprep.subr.bf16.mxu0 0
    %2100 = vmatpush1.bf16.msra.mxu0 %v2038
    %2101 = vmatprep.subr.bf16.mxu0 0
    %2102 = vmatpush1.bf16.msra.mxu0 %v2039
    %2103 = vmatprep.subr.bf16.mxu0 0
    %2104 = vmatpush1.bf16.msra.mxu0 %v2040
    %2105 = vmatprep.mubr.bf16.mxu0 %v1924
    %2106 = vmatmul.mubr.bf16.gmra.mrb[0].mxu0 %v1923
    %v2107 = vpop.f32.mrb[0].mxu0
    %v2108 = vadd.f32 0.0, %v2107
    %v2109 = vpop.f32.mrb[0].mxu0
    %v2110 = vpop.f32.mrb[0].mxu0
    %v2111 = vpop.f32.mrb[0].mxu0
    %2112 = vdwg.mxu0
    %2113 = vmatprep.subr.bf16.mxu0 0
    %2114 = vmatpush1.bf16.msra.mxu0 %v2041
    %2115 = vmatprep.subr.bf16.mxu0 0
    %2116 = vmatpush1.bf16.msra.mxu0 %v2042
    %2117 = vmatprep.subr.bf16.mxu0 0
    %2118 = vmatpush1.bf16.msra.mxu0 %v2043
    %2119 = vmatprep.subr.bf16.mxu0 0
    %2120 = vmatpush1.bf16.msra.mxu0 %v2044
    %2121 = vmatprep.subr.bf16.mxu0 0
    %2122 = vmatpush1.bf16.msra.mxu0 %v2045
    %2123 = vmatprep.subr.bf16.mxu0 0
    %2124 = vmatpush1.bf16.msra.mxu0 %v2046
    %2125 = vmatprep.subr.bf16.mxu0 0
    %2126 = vmatpush1.bf16.msra.mxu0 %v2047
    %2127 = vmatprep.subr.bf16.mxu0 0
    %2128 = vmatpush1.bf16.msra.mxu0 %v2048
    %2129 = vmatprep.subr.bf16.mxu0 0
    %2130 = vmatpush1.bf16.msra.mxu0 0
    %2131 = vmatprep.subr.bf16.mxu0 0
    %2132 = vmatpush1.bf16.msra.mxu0 0
    %2133 = vmatprep.subr.bf16.mxu0 0
    %2134 = vmatpush1.bf16.msra.mxu0 0
    %2135 = vmatprep.subr.bf16.mxu0 0
    %2136 = vmatpush1.bf16.msra.mxu0 0
    %2137 = vmatprep.subr.bf16.mxu0 0
    %2138 = vmatpush1.bf16.msra.mxu0 0
    %2139 = vmatprep.subr.bf16.mxu0 0
    %2140 = vmatpush1.bf16.msra.mxu0 0
    %2141 = vmatprep.subr.bf16.mxu0 0
    %2142 = vmatpush1.bf16.msra.mxu0 0
    %2143 = vmatprep.subr.bf16.mxu0 0
    %2144 = vmatpush1.bf16.msra.mxu0 0
    %2145 = vmatprep.mubr.bf16.mxu0 0
    %2146 = vmatmul.mubr.bf16.gmra.mrb[0].mxu0 %v1925
    %v2147 = vpop.f32.mrb[0].mxu0
    %v2148 = vadd.f32 %v2108, %v2147
    %v2149 = vpop.f32.mrb[0].mxu0
    %v2150 = vpop.f32.mrb[0].mxu0
    %v2151 = vpop.f32.mrb[0].mxu0
    %2152 = vdwg.mxu0
    %v2153 = vpack.c.bf16 %v2148, %v2148
    %v2154 = vlaneseq
    %v2155 = vshrl.u32 %v2154, 7
    %v2156 = vsub.s32 6, %v2155
    %v2157 = vrot.slane %v69, %v2156
    %v2158 = vmul.f32 %v2148, %v2157
    %v2159 = vsel %vm873, %v2158, 0.0
    %2160 = vadd.xlane.f32.xlu0 %v2159
    %v2161 = vpop.xlane.xlu0 %2160
    %v2162 = vld [vmem:[#allocation6 + $0x558] sm:$0xf]
    %v2163 = vld [vmem:[#allocation6 + $0x564] sm:$0xf]
    %v2166 = vunpack.c.l.b16 %v2162
    %v2167 = vunpack.c.l.b16 %v2163
    %v2168 = vpack.c.b16 %v2167, %v2166
    %2170 = vmatprep.subr.bf16.mxu0 0
    %2171 = vmatpush1.bf16.xpose.msra.mxu0 %v2153
    %2172 = vmatprep.subr.bf16.mxu0 0
    %2173 = vmatpush1.bf16.xpose.msra.mxu0 0
    %2174 = vmatprep.subr.bf16.mxu0 0
    %2175 = vmatpush1.bf16.xpose.msra.mxu0 0
    %2176 = vmatprep.subr.bf16.mxu0 0
    %2177 = vmatpush1.bf16.xpose.msra.mxu0 0
    %2178 = vmatprep.subr.bf16.mxu0 0
    %2179 = vmatpush1.bf16.xpose.msra.mxu0 0
    %2180 = vmatprep.subr.bf16.mxu0 0
    %2181 = vmatpush1.bf16.xpose.msra.mxu0 0
    %2182 = vmatprep.subr.bf16.mxu0 0
    %2183 = vmatpush1.bf16.xpose.msra.mxu0 0
    %2184 = vmatprep.subr.bf16.mxu0 0
    %2185 = vmatpush1.bf16.xpose.msra.mxu0 0
    %2186 = vmatprep.subr.bf16.mxu0 0
    %2187 = vmatpush1.bf16.xpose.msra.mxu0 0
    %2188 = vmatprep.subr.bf16.mxu0 0
    %2189 = vmatpush1.bf16.xpose.msra.mxu0 0
    %2190 = vmatprep.subr.bf16.mxu0 0
    %2191 = vmatpush1.bf16.xpose.msra.mxu0 0
    %2192 = vmatprep.subr.bf16.mxu0 0
    %2193 = vmatpush1.bf16.xpose.msra.mxu0 0
    %2194 = vmatprep.subr.bf16.mxu0 0
    %2195 = vmatpush1.bf16.xpose.msra.mxu0 0
    %2196 = vmatprep.subr.bf16.mxu0 0
    %2197 = vmatpush1.bf16.xpose.msra.mxu0 0
    %2198 = vmatprep.subr.bf16.mxu0 0
    %2199 = vmatpush1.bf16.xpose.msra.mxu0 0
    %2200 = vmatprep.subr.bf16.mxu0 0
    %2201 = vmatpush1.bf16.xpose.msra.mxu0 0
    %2202 = vmatprep.mubr.bf16.mxu0 0
    %2203 = vmatmul.mubr.bf16.gmra.mrb[0].mxu0 %v2168
    %v2204 = vpop.f32.mrb[0].mxu0
    %v2205 = vadd.f32 0.0, %v2204
    %v2206 = vpop.f32.mrb[0].mxu0
    %v2207 = vpop.f32.mrb[0].mxu0
    %v2208 = vpop.f32.mrb[0].mxu0
    %2209 = vdwg.mxu0
    %v2210 = vlaneseq
    %v2211 = vshrl.u32 %v2210, 7
    %v2212 = vsub.s32 0, %v2211
    %v2213 = vrot.slane %v2205, %v2212
    %v2214 = vadd.f32 %v2161, %v2213
    %vm2215 = vcmp.gt.f32.partialorder %v2214, 0.0
    %v2216 = vmul.f32 %v2214, 0.2
    %v2217 = vsel %vm2215, %v2214, %v2216
    %v2218 = vsel %vm997, %v2217, -9e+15
    %v2219 = vsel %vm1629, %v2218, -inf
    %2220 = vmax.xlane.f32.xlu0 %v2219
    %v2221 = vpop.xlane.xlu0 %2220
    %v2222 = vsub.f32 %v2218, %v2221
    %v2223 = vmul.f32 %v2222, 1.442695
    %v2224 = vpow.pop %v2223
    %v2225 = vsel %vm1629, %v2224, 0.0
    %2226 = vadd.xlane.f32.xlu0 %v2225
    %v2227 = vpop.xlane.xlu0 %2226
    %v2228 = vrcp.pop %v2227
    %v2229 = vmul.f32 %v2224, %v2228
    %v2230 = vpack.c.bf16 %v2229, %v2229
    %v2232 = vsel %vm1642, %v2230, 0
    %v2235 = vand.u32 %v2153, %v1649
    %2237 = vmatprep.subr.bf16.mxu0 0
    %2238 = vmatpush1.bf16.msra.mxu0 %v2235
    %2239 = vmatprep.subr.bf16.mxu0 0
    %2240 = vmatpush1.bf16.msra.mxu0 0
    %2241 = vmatprep.subr.bf16.mxu0 0
    %2242 = vmatpush1.bf16.msra.mxu0 0
    %2243 = vmatprep.subr.bf16.mxu0 0
    %2244 = vmatpush1.bf16.msra.mxu0 0
    %2245 = vmatprep.subr.bf16.mxu0 0
    %2246 = vmatpush1.bf16.msra.mxu0 0
    %2247 = vmatprep.subr.bf16.mxu0 0
    %2248 = vmatpush1.bf16.msra.mxu0 0
    %2249 = vmatprep.subr.bf16.mxu0 0
    %2250 = vmatpush1.bf16.msra.mxu0 0
    %2251 = vmatprep.subr.bf16.mxu0 0
    %2252 = vmatpush1.bf16.msra.mxu0 0
    %2253 = vmatprep.subr.bf16.mxu0 0
    %2254 = vmatpush1.bf16.msra.mxu0 0
    %2255 = vmatprep.subr.bf16.mxu0 0
    %2256 = vmatpush1.bf16.msra.mxu0 0
    %2257 = vmatprep.subr.bf16.mxu0 0
    %2258 = vmatpush1.bf16.msra.mxu0 0
    %2259 = vmatprep.subr.bf16.mxu0 0
    %2260 = vmatpush1.bf16.msra.mxu0 0
    %2261 = vmatprep.subr.bf16.mxu0 0
    %2262 = vmatpush1.bf16.msra.mxu0 0
    %2263 = vmatprep.subr.bf16.mxu0 0
    %2264 = vmatpush1.bf16.msra.mxu0 0
    %2265 = vmatprep.subr.bf16.mxu0 0
    %2266 = vmatpush1.bf16.msra.mxu0 0
    %2267 = vmatprep.subr.bf16.mxu0 0
    %2268 = vmatpush1.bf16.msra.mxu0 0
    %2269 = vmatprep.mubr.bf16.mxu0 0
    %2270 = vmatmul.mubr.bf16.gmra.mrb[0].mxu0 %v2232
    %v2271 = vpop.f32.mrb[0].mxu0
    %v2272 = vadd.f32 0.0, %v2271
    %v2273 = vpop.f32.mrb[0].mxu0
    %v2274 = vpop.f32.mrb[0].mxu0
    %v2275 = vpop.f32.mrb[0].mxu0
    %2276 = vdwg.mxu0
    %vm2277 = vcmp.gt.f32.partialorder %v2272, 0.0
    %v2278 = vmin.f32 %v2272, 0.0
    %v2279 = vmul.f32 %v2278, 1.442695
    %v2280 = vpow.pop %v2279
    %v2281 = vsub.f32 %v2280, 1.0
    %v2282 = vsel %vm2277, %v2272, %v2281
    %vm2283 = vcmask 45056
    %v2284 = vsel %vm2283, %v2282, -inf
    %2285 = vmax.xlane.f32.xlu0 %v2284
    %v2286 = vpop.xlane.xlu0 %2285
    %v2287 = vsub.f32 %v2282, %v2286
    %v2288 = vmul.f32 %v2287, 1.442695
    %v2289 = vpow.pop %v2288
    %v2290 = vsel %vm2283, %v2289, 0.0
    %2291 = vadd.xlane.f32.xlu0 %v2290
    %v2292 = vpop.xlane.xlu0 %2291
    %v2293 = vlog2.pop %v2292
    %v2294 = vmul.f32 %v2293, 0.6931472
    %v2295 = vsub.f32 %v2287, %v2294
    %2296 = vst.msk [vmem:[#allocation9] sm:$0x1f] %vm2283, %v2295
    // Predicated region
    $region38: #{grm_forward.1} parent=1 // pred_check
      _
    $region39: #{grm_forward.1} parent=1 // pred_check_branch
      %2298 = sbr.rel (0) target = $region41
    $region40: #{grm_forward.1} parent=1 // pred_region
      %s2300 = ssub.s32 128, 128
      %2301 = vsyncadd [#allocation5], %s2300
      %s2303 = sshll.u32 [#allocation9], 4
      %s2304 = int_to_ptr.vmem [resolvable:$true] %s2303
      %2306 = dma.vmem_to_hbm [thread:$0]  %s2304, 128, %s6, [#allocation5]
    $region41: #{grm_forward.1} parent=1 // pred_fallthru
      _
    // Predicated region
    $region42: #{grm_forward.1} parent=1 // pred_check
      _
    $region43: #{grm_forward.1} parent=1 // pred_check_branch
      %2308 = sbr.rel (0) target = $region45
    $region44: #{grm_forward.1} parent=1 // pred_region
      %s2310 = ssub.s32 16, 16
      %2311 = vsyncadd [#allocation11], %s2310
      %s2313 = sshll.u32 [#allocation10], 4
      %s2314 = int_to_ptr.vmem [resolvable:$true] %s2313
      %2316 = dma.vmem_to_hbm [thread:$0]  %s2314, 16, %s7, [#allocation11]
    $region45: #{grm_forward.1} parent=1 // pred_fallthru
      _
    // Predicated region
    $region46: #{grm_forward.1} parent=1 // pred_check
      _
    $region47: #{grm_forward.1} parent=1 // pred_check_branch
      %2318 = sbr.rel (0) target = $region49
    $region48: #{grm_forward.1} parent=1 // pred_region
      %2319 = dma.done [#allocation5], 128
    $region49: #{grm_forward.1} parent=1 // pred_fallthru
      _
    // Predicated region
    $region50: #{grm_forward.1} parent=1 // pred_check
      _
    $region51: #{grm_forward.1} parent=1 // pred_check_branch
      %2321 = sbr.rel (0) target = $region53
    $region52: #{grm_forward.1} parent=1 // pred_region
      %2322 = dma.done [#allocation11], 16
    $region53: #{grm_forward.1} parent=1 // pred_fallthru
      _
    %2323 = vsyncpa [#allocation4], 1
    %2324 = vsyncpa [#allocation7], 1
    %2325 = vsyncpa [#allocation5], 1
    %2326 = vsyncpa [#allocation11], 1

</llo_original>
